<compile_context>
chip_gen: v7x
topology: tpu7x:2x2x1
jax: 0.10.0
libtpu: 0.0.40
codegen_flags: <defaults>
</compile_context>

<pallas_src>
import functools

import jax
import jax.numpy as jnp
from jax import lax
from jax.experimental import pallas as pl
from jax.experimental.pallas import tpu as pltpu

NEG_SLOPE = 0.2   # LeakyReLU(0.2)
IN_EPS = 1e-5     # nn.InstanceNorm2d default eps


# ---------------------------------------------------------------------------
# Pallas kernel: fused reflection-padded conv + bias [+ InstanceNorm] [+ ReLU].
# ---------------------------------------------------------------------------
def _conv_layer_kernel(*refs, K, H, W, B, apply_relu, apply_in):
    """VMEM refs:
      x_ref   (B, Cin, Hp, Wp)  compute dtype, reflection-padded images (CHW)
      w_ref   (Co, K*K*Cin)     compute dtype, im2col weight slab
      b_ref   (Co, 1)           f32 bias
      [g_ref  (Co, 1)           f32 instance-norm gamma]
      [bt_ref (Co, 1)           f32 instance-norm beta]
      o_ref   (B, Co, H*W)      f32 output (H*W on the lane axis)
    """
    if apply_in:
        x_ref, w_ref, b_ref, g_ref, bt_ref, o_ref = refs
    else:
        x_ref, w_ref, b_ref, o_ref = refs
        g_ref = bt_ref = None

    Cin = x_ref.shape[1]
    HW = H * W

    # Fused im2col: one (K*K*Cin, B*HW) slab from static window slices.
    # Row order (kh, kw, ci) matches the wrapper's weight-slab column order.
    cols = []
    for b in range(B):
        xp = x_ref[b]                                      # (Cin, Hp, Wp)
        rows = []
        for kh in range(K):
            for kw in range(K):
                rows.append(xp[:, kh:kh + H, kw:kw + W].reshape(Cin, HW))
        cols.append(jnp.concatenate(rows, axis=0))         # (K*K*Cin, HW)
    slab = cols[0] if B == 1 else jnp.concatenate(cols, axis=-1)

    # ONE MXU matmul; (Co, B*HW) accumulator is lane-dense (no transpose).
    acc = jnp.dot(w_ref[...], slab, preferred_element_type=jnp.float32)
    acc = acc + b_ref[...]                                 # (Co, 1) broadcast

    for b in range(B):
        y = acc[:, b * HW:(b + 1) * HW]                    # (Co, HW) lane slice
        if apply_in:
            mean = jnp.mean(y, axis=-1, keepdims=True)
            var = jnp.mean((y - mean) ** 2, axis=-1, keepdims=True)
            y = (y - mean) * lax.rsqrt(var + IN_EPS)
            y = y * g_ref[...] + bt_ref[...]
        if apply_relu:
            y = jnp.where(y >= 0.0, y, NEG_SLOPE * y)
        o_ref[b] = y.astype(o_ref.dtype)


# ---------------------------------------------------------------------------
# Wrapper: PyTorch-style NCHW in / NCHW out.
# ---------------------------------------------------------------------------
def conv_layer(x_nchw, weight_oihw, bias, *, kernel_size, stride=1, relu=True,
               instance_norm=False, in_gamma=None, in_beta=None,
               compute_dtype=jnp.bfloat16, images_per_block=1):
    """ConvLayer.forward: reflection pad -> conv2d -> [instance norm] -> LeakyReLU."""
    K = kernel_size
    p = K // 2
    N, Cin, H, W = x_nchw.shape
    Co = weight_oihw.shape[0]
    if p > 0 and (H <= p or W <= p):
        raise ValueError("ReflectionPad2d requires H, W > kernel_size // 2")

    B = images_per_block
    if B < 1 or N % B != 0:
        B = 1                      # fall back to one image per grid step

    # Channels-first padding (no layout transpose); cast to compute dtype ONCE.
    xp = jnp.pad(x_nchw, ((0, 0), (0, 0), (p, p), (p, p)),
                 mode="reflect").astype(compute_dtype)
    Hp, Wp = H + 2 * p, W + 2 * p
    Hf, Wf = Hp - K + 1, Wp - K + 1              # dense (stride-1) output size
    HW = Hf * Wf

    # Single (Co, K*K*Cin) weight slab; column order (kh, kw, ci) == slab rows.
    w_r = jnp.transpose(weight_oihw, (0, 2, 3, 1)).reshape(Co, K * K * Cin)
    w_r = w_r.astype(compute_dtype)
    b_r = bias.reshape(Co, 1).astype(jnp.float32)

    # torch order: conv -> [IN] -> [LeakyReLU].  IN is fused only for stride=1
    # (stats must be taken on the strided output otherwise).
    fuse_in = instance_norm and stride == 1
    fuse_relu = relu and (not instance_norm or fuse_in)

    if instance_norm:
        in_gamma = jnp.ones((Co,), jnp.float32) if in_gamma is None else in_gamma
        in_beta = jnp.zeros((Co,), jnp.float32) if in_beta is None else in_beta

    in_specs = [
        pl.BlockSpec((B, Cin, Hp, Wp), lambda n: (n, 0, 0, 0)),   # per-step imgs
        pl.BlockSpec((Co, K * K * Cin), lambda n: (0, 0)),        # resident W
        pl.BlockSpec((Co, 1), lambda n: (0, 0)),                  # resident bias
    ]
    args = [xp, w_r, b_r]
    if fuse_in:
        in_specs += [pl.BlockSpec((Co, 1), lambda n: (0, 0)),
                     pl.BlockSpec((Co, 1), lambda n: (0, 0))]
        args += [in_gamma.reshape(Co, 1).astype(jnp.float32),
                 in_beta.reshape(Co, 1).astype(jnp.float32)]

    # TODO(synk): at production image sizes, tile output rows with a (K-1)-row
    # halo so the per-step block stays under v7x's 32 MiB scoped-VMEM default.
    out = pl.pallas_call(
        functools.partial(_conv_layer_kernel, K=K, H=Hf, W=Wf, B=B,
                          apply_relu=fuse_relu, apply_in=fuse_in),
        out_shape=jax.ShapeDtypeStruct((N, Co, HW), jnp.float32),
        grid_spec=pltpu.PrefetchScalarGridSpec(
            num_scalar_prefetch=0,
            grid=(N // B,),
            in_specs=in_specs,
            out_specs=pl.BlockSpec((B, Co, HW), lambda n: (n, 0, 0)),
        ),
        compiler_params=pltpu.CompilerParams(
            dimension_semantics=("parallel",)),   # shard steps over v7x's 2 TCs
    )(*args)

    out = out.reshape(N, Co, Hf, Wf)              # already NCHW; free reshape
    if stride > 1:
        # TODO(synk): stride>1 subsamples the dense stride-1 output (exact
        # semantics, wastes stride^2 of conv work; in-kernel strided windows
        # would remove it).
        out = out[:, :, ::stride, ::stride]
    if instance_norm and not fuse_in:
        # Plain-JAX fallback only used for stride>1.
        mean = jnp.mean(out, axis=(2, 3), keepdims=True)
        var = jnp.var(out, axis=(2, 3), keepdims=True)
        out = (out - mean) * lax.rsqrt(var + IN_EPS)
        out = out * in_gamma[None, :, None, None] + in_beta[None, :, None, None]
        if relu:
            out = jnp.where(out >= 0.0, out, NEG_SLOPE * out)
    return out


# ---------------------------------------------------------------------------
# Pure-JAX reference (replicates PyTorch forward exactly, NCHW, f32).
# ---------------------------------------------------------------------------
def _reference_nchw(x, w, b, K, stride=1, relu=True, instance_norm=False,
                    gamma=None, beta=None):
    p = K // 2
    xp = jnp.pad(x, ((0, 0), (0, 0), (p, p), (p, p)), mode="reflect")
    y = lax.conv_general_dilated(
        xp, w, (stride, stride), "VALID",
        dimension_numbers=("NCHW", "OIHW", "NCHW"),
        precision=lax.Precision.HIGHEST)
    y = y + b[None, :, None, None]
    if instance_norm:
        mean = jnp.mean(y, axis=(2, 3), keepdims=True)
        var = jnp.var(y, axis=(2, 3), keepdims=True)
        y = (y - mean) * lax.rsqrt(var + IN_EPS)
        y = y * gamma[None, :, None, None] + beta[None, :, None, None]
    if relu:
        y = jnp.where(y >= 0, y, NEG_SLOPE * y)
    return y


# ---------------------------------------------------------------------------
if __name__ == "__main__":
    N, Cin, H, W = 2, 4, 16, 16
    Co, K, stride = 8, 3, 1

    key = jax.random.PRNGKey(0)
    kx, kw, kb, kg, kbe = jax.random.split(key, 5)
    x = jax.random.normal(kx, (N, Cin, H, W), dtype=jnp.float32)
    w = 0.1 * jax.random.normal(kw, (Co, Cin, K, K), dtype=jnp.float32)
    b = 0.05 * jax.random.normal(kb, (Co,), dtype=jnp.float32)
    gamma = 1.0 + 0.1 * jax.random.normal(kg, (Co,), dtype=jnp.float32)
    beta = 0.05 * jax.random.normal(kbe, (Co,), dtype=jnp.float32)

    ref = jax.block_until_ready(_reference_nchw(x, w, b, K=K, stride=stride))

    # Default perf path: bf16 MXU operands / f32 accumulation, 1 image per step
    # (>= 2 parallel grid steps -> both v7x TensorCores stay busy).
    out_bf16 = jax.block_until_ready(
        conv_layer(x, w, b, kernel_size=K, stride=stride))
    assert out_bf16.shape == ref.shape == (N, Co, H, W), out_bf16.shape
    err = float(jnp.max(jnp.abs(out_bf16 - ref)))
    assert jnp.allclose(out_bf16, ref, atol=2e-2, rtol=2e-2), err

    # Exactness of the fused algorithm itself: f32 MXU operands.
    out_f32 = jax.block_until_ready(
        conv_layer(x, w, b, kernel_size=K, stride=stride,
                   compute_dtype=jnp.float32))
    err = float(jnp.max(jnp.abs(out_f32 - ref)))
    assert jnp.allclose(out_f32, ref, atol=2e-3, rtol=2e-3), err

    # Batch folding path (single-TC amortization: whole batch in one grid step).
    out_fold = jax.block_until_ready(
        conv_layer(x, w, b, kernel_size=K, stride=stride, images_per_block=N))
    err = float(jnp.max(jnp.abs(out_fold - ref)))
    assert jnp.allclose(out_fold, ref, atol=2e-2, rtol=2e-2), err

    # Fused InstanceNorm + LeakyReLU path (f32 for a tight check).
    ref_in = jax.block_until_ready(_reference_nchw(
        x, w, b, K=K, stride=stride, instance_norm=True, gamma=gamma, beta=beta))
    out_in = jax.block_until_ready(
        conv_layer(x, w, b, kernel_size=K, stride=stride, instance_norm=True,
                   in_gamma=gamma, in_beta=beta, compute_dtype=jnp.float32))
    err = float(jnp.max(jnp.abs(out_in - ref_in)))
    assert jnp.allclose(out_in, ref_in, atol=5e-3, rtol=5e-3), err

    print("KERNEL_OK")
</pallas_src>

<mosaic_0001>
module attributes {stable_mosaic.version = 11 : i64} {
  func.func @_conv_layer_kernel(%arg0: i32, %arg1: memref<1x4x18x18xbf16, #tpu.memory_space<vmem>>, %arg2: memref<8x36xbf16, #tpu.memory_space<vmem>>, %arg3: memref<8x1xf32, #tpu.memory_space<vmem>>, %arg4: memref<1x8x256xf32, #tpu.memory_space<vmem>>) attributes {dimension_semantics = [#tpu.dimension_semantics<parallel>], iteration_bounds = array<i64: 2>, scalar_prefetch = 0 : i64, scratch_operands = 0 : i64, tpu.core_type = #tpu.core_type<tc>, window_params = [{transform_indices = @transform_0, window_bounds = array<i64: 1, 4, 18, 18>}, {pipeline_mode = #tpu.pipeline_mode<synchronous>, transform_indices = @transform_1, window_bounds = array<i64: 8, 36>}, {pipeline_mode = #tpu.pipeline_mode<synchronous>, transform_indices = @transform_2, window_bounds = array<i64: 8, 1>}, {transform_indices = @transform_3, window_bounds = array<i64: 1, 8, 256>}]} {
    %c0 = arith.constant 0 : index
    %c0_0 = arith.constant 0 : index
    %c0_1 = arith.constant 0 : index
    %c0_2 = arith.constant 0 : index
    %0 = vector.load %arg1[%c0, %c0_0, %c0_1, %c0_2] : memref<1x4x18x18xbf16, #tpu.memory_space<vmem>>, vector<1x4x18x18xbf16>
    %1 = vector.shape_cast %0 : vector<1x4x18x18xbf16> to vector<4x18x18xbf16>
    %2 = vector.extract_strided_slice %1 {offsets = [0, 0, 0], sizes = [4, 16, 16], strides = [1, 1, 1]} : vector<4x18x18xbf16> to vector<4x16x16xbf16>
    %3 = vector.shape_cast %2 : vector<4x16x16xbf16> to vector<4x256xbf16>
    %4 = vector.extract_strided_slice %1 {offsets = [0, 0, 1], sizes = [4, 16, 16], strides = [1, 1, 1]} : vector<4x18x18xbf16> to vector<4x16x16xbf16>
    %5 = vector.shape_cast %4 : vector<4x16x16xbf16> to vector<4x256xbf16>
    %6 = vector.extract_strided_slice %1 {offsets = [0, 0, 2], sizes = [4, 16, 16], strides = [1, 1, 1]} : vector<4x18x18xbf16> to vector<4x16x16xbf16>
    %7 = vector.shape_cast %6 : vector<4x16x16xbf16> to vector<4x256xbf16>
    %8 = vector.extract_strided_slice %1 {offsets = [0, 1, 0], sizes = [4, 16, 16], strides = [1, 1, 1]} : vector<4x18x18xbf16> to vector<4x16x16xbf16>
    %9 = vector.shape_cast %8 : vector<4x16x16xbf16> to vector<4x256xbf16>
    %10 = vector.extract_strided_slice %1 {offsets = [0, 1, 1], sizes = [4, 16, 16], strides = [1, 1, 1]} : vector<4x18x18xbf16> to vector<4x16x16xbf16>
    %11 = vector.shape_cast %10 : vector<4x16x16xbf16> to vector<4x256xbf16>
    %12 = vector.extract_strided_slice %1 {offsets = [0, 1, 2], sizes = [4, 16, 16], strides = [1, 1, 1]} : vector<4x18x18xbf16> to vector<4x16x16xbf16>
    %13 = vector.shape_cast %12 : vector<4x16x16xbf16> to vector<4x256xbf16>
    %14 = vector.extract_strided_slice %1 {offsets = [0, 2, 0], sizes = [4, 16, 16], strides = [1, 1, 1]} : vector<4x18x18xbf16> to vector<4x16x16xbf16>
    %15 = vector.shape_cast %14 : vector<4x16x16xbf16> to vector<4x256xbf16>
    %16 = vector.extract_strided_slice %1 {offsets = [0, 2, 1], sizes = [4, 16, 16], strides = [1, 1, 1]} : vector<4x18x18xbf16> to vector<4x16x16xbf16>
    %17 = vector.shape_cast %16 : vector<4x16x16xbf16> to vector<4x256xbf16>
    %18 = vector.extract_strided_slice %1 {offsets = [0, 2, 2], sizes = [4, 16, 16], strides = [1, 1, 1]} : vector<4x18x18xbf16> to vector<4x16x16xbf16>
    %19 = vector.shape_cast %18 : vector<4x16x16xbf16> to vector<4x256xbf16>
    %20 = tpu.concatenate %3, %5, %7, %9, %11, %13, %15, %17, %19 in 0 : vector<4x256xbf16>, vector<4x256xbf16>, vector<4x256xbf16>, vector<4x256xbf16>, vector<4x256xbf16>, vector<4x256xbf16>, vector<4x256xbf16>, vector<4x256xbf16>, vector<4x256xbf16> -> vector<36x256xbf16>
    %c0_3 = arith.constant 0 : index
    %c0_4 = arith.constant 0 : index
    %21 = vector.load %arg2[%c0_3, %c0_4] : memref<8x36xbf16, #tpu.memory_space<vmem>>, vector<8x36xbf16>
    %cst = arith.constant dense<0.000000e+00> : vector<8x256xf32>
    %22 = tpu.matmul %21, %20, %cst {dimension_numbers = #tpu.dot_dimension_numbers<[1], [0], [0], [1], [0, 0, 1, 1], [], []>} : vector<8x36xbf16>, vector<36x256xbf16>, vector<8x256xf32> -> vector<8x256xf32>
    %c0_5 = arith.constant 0 : index
    %c0_6 = arith.constant 0 : index
    %23 = vector.load %arg3[%c0_5, %c0_6] : memref<8x1xf32, #tpu.memory_space<vmem>>, vector<8x1xf32>
    %24 = vector.broadcast %23 : vector<8x1xf32> to vector<8x256xf32>
    %25 = arith.addf %22, %24 : vector<8x256xf32>
    %cst_7 = arith.constant 0.000000e+00 : f32
    %26 = vector.broadcast %cst_7 : f32 to vector<8x256xf32>
    %27 = arith.cmpf oge, %25, %26 : vector<8x256xf32>
    %cst_8 = arith.constant 2.000000e-01 : f32
    %28 = vector.broadcast %cst_8 : f32 to vector<8x256xf32>
    %29 = arith.mulf %28, %25 : vector<8x256xf32>
    %30 = arith.select %27, %25, %29 : vector<8x256xi1>, vector<8x256xf32>
    %c0_9 = arith.constant 0 : index
    %c0_10 = arith.constant 0 : index
    %c0_11 = arith.constant 0 : index
    %31 = vector.load %arg4[%c0_9, %c0_10, %c0_11] : memref<1x8x256xf32, #tpu.memory_space<vmem>>, vector<1x8x256xf32>
    %32 = vector.shape_cast %31 : vector<1x8x256xf32> to vector<8x256xf32>
    %33 = vector.shape_cast %30 : vector<8x256xf32> to vector<1x8x256xf32>
    tpu.vector_store %arg4[%c0_9, %c0_10, %c0_11], %33 {strides = array<i32>} : memref<1x8x256xf32, #tpu.memory_space<vmem>>, vector<1x8x256xf32>,
    return
  }
  func.func @transform_0(%arg0: i32) -> (i32, i32, i32, i32) {
    %c0_i32 = arith.constant 0 : i32
    %c0_i32_0 = arith.constant 0 : i32
    %c0_i32_1 = arith.constant 0 : i32
    %c0_i32_2 = arith.constant 0 : i32
    return %arg0, %c0_i32, %c0_i32_0, %c0_i32_1 : i32, i32, i32, i32
  }
  func.func @transform_1(%arg0: i32) -> (i32, i32) {
    %c0_i32 = arith.constant 0 : i32
    %c0_i32_0 = arith.constant 0 : i32
    %c0_i32_1 = arith.constant 0 : i32
    return %c0_i32, %c0_i32_0 : i32, i32
  }
  func.func @transform_2(%arg0: i32) -> (i32, i32) {
    %c0_i32 = arith.constant 0 : i32
    %c0_i32_0 = arith.constant 0 : i32
    %c0_i32_1 = arith.constant 0 : i32
    return %c0_i32, %c0_i32_0 : i32, i32
  }
  func.func @transform_3(%arg0: i32) -> (i32, i32, i32) {
    %c0_i32 = arith.constant 0 : i32
    %c0_i32_0 = arith.constant 0 : i32
    %c0_i32_1 = arith.constant 0 : i32
    return %arg0, %c0_i32, %c0_i32_0 : i32, i32, i32
  }
}

</mosaic_0001>

<llo_original>
// kernel: tpu_custom_call.1
$region0: #{tpu_custom_call.1}
  #allocation0 [shape = 'u32[]', space=smem, size = 0x4, offset = 0x4, fixed_abs, tag = 'smem constant byte address 0x4 - core index']
  #allocation1 [shape = 'u32[144,128]{1,0:T(1,128)}', space=vmem, size = 0x12000, scoped, tag = 'internal scratch']
  %s0 = inlined_call_operand.vmem [shape: bf16[2,4,18,18], index: 0, kind: input, shape index: {}]
  %s1 = inlined_call_operand.vmem [shape: bf16[8,36], index: 1, kind: input, shape index: {}]
  %s2 = inlined_call_operand.vmem [shape: f32[8,1], index: 2, kind: input, shape index: {}]
  %s3 = inlined_call_operand.hbm [shape: f32[2,8,256], index: 3, kind: output, shape index: {}]
  %s4 = sld [smem:[#allocation0]]
  $region45: #{tpu_custom_call.1} parent=0
    _
  %s6 = ssub.s32 1, %s4
  %s7 = scalar_select 0, %s6, %s4
  $region1: #{tpu_custom_call.1} parent=0
    #allocation2 [shape = 'u8[16384]{0}', space=vmem, size = 0x4000, scoped, tag = 'output window, operand 0']
    #allocation3 [shape = 's32[2]{0}', space=sflag, size = 0x8, scoped, tag = 'scoped memory for tpu_custom_call.1']
    %8 = vsyncpa [#allocation3], 0
    %s9 = scalar_lea.sflag [#allocation3], 1
    %10 = vsyncpa %s9, 0
    loop: start=0, step=1, limit=4
    $region2: #{tpu_custom_call.1} parent=1 // loop_pre_header
      _
    $region3: #{tpu_custom_call.1} parent=1 // loop_header
      %s12 = sphi 0, %s16
      %p13 = scmp.ge.s32.totalorder %s12, 4
      %s22 = sphi 0, %s24
      %s25 = sphi 0, %s22
      %s26 = sphi 0, %s25
      %s42 = sphi 0, %s26
      %s46 = sphi 0, %s46
      %s48 = sphi 0, %s46
      %s49 = sphi 0, %s48
      %s63 = sphi 0, %s49
      %s67 = sphi 0, %s67
      %s69 = sphi 0, %s67
      %s70 = sphi 0, %s69
      %s84 = sphi 0, %s70
      %s90 = sphi 0, %s92
      %s93 = sphi 0, %s90
      %s94 = sphi 0, %s93
      %s110 = sphi 0, %s94
    $region4: #{tpu_custom_call.1} parent=1 // loop_header_branch
      %15 = sbr.rel (%p13) target = $region8
    $region5: #{tpu_custom_call.1} parent=1 // loop_body
      %s17 = ssub.s32 %s12, 1
      %s18 = ssub.s32 %s12, 2
      %s19 = sadd.s32 %s12, 1
      %s20 = ssub.s32 %s12, %s19
      %p21 = scmp.eq.s32.totalorder %s20, 0
      %s23 = sadd.s32 %s22, 1
      %s24 = scalar_select %p21, %s22, %s23
      %p27 = pneg %p21
      %p28 = scmp.eq.s32.totalorder %s12, 1
      %p29 = por %p27, %p28
      %p30 = scmp.ne.s32.totalorder %s22, %s25
      %p31 = scmp.eq.s32.totalorder %s12, 0
      %p32 = por %p30, %p31
      %p33 = scmp.ne.s32.totalorder %s22, %s25
      %p34 = scmp.eq.s32.totalorder %s17, 1
      %p35 = por %p33, %p34
      %p36 = scmp.ne.s32.totalorder %s25, %s26
      %p37 = scmp.eq.s32.totalorder %s17, 0
      %p38 = por %p36, %p37
      %p39 = scmp.ne.s32.totalorder %s25, %s26
      %p40 = scmp.eq.s32.totalorder %s18, 1
      %p41 = por %p39, %p40
      %p43 = scmp.ne.s32.totalorder %s26, %s42
      %p44 = scmp.eq.s32.totalorder %s18, 0
      %p45 = por %p43, %p44
      %s47 = sadd.s32 %s46, 1
      %p50 = scmp.eq.s32.totalorder %s12, 1
      %p51 = scmp.ne.s32.totalorder %s46, %s48
      %p52 = scmp.eq.s32.totalorder %s12, 0
      %p53 = por %p51, %p52
      %p54 = scmp.ne.s32.totalorder %s46, %s48
      %p55 = scmp.eq.s32.totalorder %s17, 1
      %p56 = por %p54, %p55
      %p57 = scmp.ne.s32.totalorder %s48, %s49
      %p58 = scmp.eq.s32.totalorder %s17, 0
      %p59 = por %p57, %p58
      %p60 = scmp.ne.s32.totalorder %s48, %s49
      %p61 = scmp.eq.s32.totalorder %s18, 1
      %p62 = por %p60, %p61
      %p64 = scmp.ne.s32.totalorder %s49, %s63
      %p65 = scmp.eq.s32.totalorder %s18, 0
      %p66 = por %p64, %p65
      %s68 = sadd.s32 %s67, 1
      %p71 = scmp.eq.s32.totalorder %s12, 1
      %p72 = scmp.ne.s32.totalorder %s67, %s69
      %p73 = scmp.eq.s32.totalorder %s12, 0
      %p74 = por %p72, %p73
      %p75 = scmp.ne.s32.totalorder %s67, %s69
      %p76 = scmp.eq.s32.totalorder %s17, 1
      %p77 = por %p75, %p76
      %p78 = scmp.ne.s32.totalorder %s69, %s70
      %p79 = scmp.eq.s32.totalorder %s17, 0
      %p80 = por %p78, %p79
      %p81 = scmp.ne.s32.totalorder %s69, %s70
      %p82 = scmp.eq.s32.totalorder %s18, 1
      %p83 = por %p81, %p82
      %p85 = scmp.ne.s32.totalorder %s70, %s84
      %p86 = scmp.eq.s32.totalorder %s18, 0
      %p87 = por %p85, %p86
      %s88 = ssub.s32 %s12, %s19
      %p89 = scmp.eq.s32.totalorder %s88, 0
      %s91 = sadd.s32 %s90, 1
      %s92 = scalar_select %p89, %s90, %s91
      %p95 = pneg %p89
      %p96 = scmp.eq.s32.totalorder %s12, 1
      %p97 = por %p95, %p96
      %p98 = scmp.ne.s32.totalorder %s90, %s93
      %p99 = scmp.eq.s32.totalorder %s12, 0
      %p100 = por %p98, %p99
      %p101 = scmp.ne.s32.totalorder %s90, %s93
      %p102 = scmp.eq.s32.totalorder %s17, 1
      %p103 = por %p101, %p102
      %p104 = scmp.ne.s32.totalorder %s93, %s94
      %p105 = scmp.eq.s32.totalorder %s17, 0
      %p106 = por %p104, %p105
      %p107 = scmp.ne.s32.totalorder %s93, %s94
      %p108 = scmp.eq.s32.totalorder %s18, 1
      %p109 = por %p107, %p108
      %p111 = scmp.ne.s32.totalorder %s94, %s110
      %p112 = scmp.eq.s32.totalorder %s18, 0
      %p113 = por %p111, %p112
      %p114 = scmp.le.s32.totalorder 1, %s12
      %p115 = scmp.lt.s32.totalorder %s12, 3
      %p116 = pnand %p114, %p115
      %p117 = pneg %p116
      // Predicated region
      $region9: #{tpu_custom_call.1} parent=5 // pred_check
        _
      $region10: #{tpu_custom_call.1} parent=5 // pred_check_branch
        %119 = sbr.rel (%p116) target = $region12
      $region11: #{tpu_custom_call.1} parent=5 // pred_region
        %s120 = ssub.s32 %s12, 1
        // Predicated region
        $region13: #{tpu_custom_call.1} parent=11 // pred_check
          %p121 = pneg %p59
        $region14: #{tpu_custom_call.1} parent=11 // pred_check_branch
          %123 = sbr.rel (%p121) target = $region16
        $region15: #{tpu_custom_call.1} parent=11 // pred_region
          _
        $region16: #{tpu_custom_call.1} parent=11 // pred_fallthru
          _
        // Predicated region
        $region17: #{tpu_custom_call.1} parent=11 // pred_check
          %p124 = pneg %p80
        $region18: #{tpu_custom_call.1} parent=11 // pred_check_branch
          %126 = sbr.rel (%p124) target = $region20
        $region19: #{tpu_custom_call.1} parent=11 // pred_region
          _
        $region20: #{tpu_custom_call.1} parent=11 // pred_fallthru
          _
      $region12: #{tpu_custom_call.1} parent=5 // pred_fallthru
        _
      %p127 = scmp.lt.s32.totalorder %s12, 2
      // Predicated region
      $region21: #{tpu_custom_call.1} parent=5 // pred_check
        %p128 = pneg %p127
      $region22: #{tpu_custom_call.1} parent=5 // pred_check_branch
        %130 = sbr.rel (%p128) target = $region24
      $region23: #{tpu_custom_call.1} parent=5 // pred_region
        // Predicated region
        $region25: #{tpu_custom_call.1} parent=23 // pred_check
          %p131 = pneg %p32
        $region26: #{tpu_custom_call.1} parent=23 // pred_check_branch
          %133 = sbr.rel (%p131) target = $region28
        $region27: #{tpu_custom_call.1} parent=23 // pred_region
          %p134 = scmp.lt.s32.totalorder %s12, 1
          %s135 = scalar_select %p134, %s12, 1
          %s136 = smul.addr %s135, 12
          %s137 = smul.addr %s136, 4
          %s138 = scalar_lea.vmem %s0, %s137
        $region28: #{tpu_custom_call.1} parent=23 // pred_fallthru
          _
      $region24: #{tpu_custom_call.1} parent=5 // pred_fallthru
        _
      %p139 = scmp.le.s32.totalorder 1, %s12
      %p140 = scmp.lt.s32.totalorder %s12, 3
      %p141 = pnand %p139, %p140
      %p142 = pneg %p141
      // Predicated region
      $region29: #{tpu_custom_call.1} parent=5 // pred_check
        _
      $region30: #{tpu_custom_call.1} parent=5 // pred_check_branch
        %144 = sbr.rel (%p141) target = $region32
      $region31: #{tpu_custom_call.1} parent=5 // pred_region
        %s145 = ssub.s32 %s12, 1
        %p146 = scmp.lt.s32.totalorder %s17, 1
        %s147 = scalar_select %p146, %s17, 1
        %s148 = smul.addr %s147, 12
        %s149 = smul.addr %s148, 4
        %s150 = scalar_lea.vmem %s0, %s149
        %p151 = pneg %p38
        %p152 = pneg %p35
        %p153 = pneg %p59
        %p154 = pneg %p56
        %p155 = pneg %p80
        %p156 = pneg %p77
        %p157 = pneg %p106
        %p158 = pneg %p103
        %s159 = sand.u32 %s93, 1
        %s160 = scalar_lea.sflag [#allocation3], %s159
        %s161 = sand.u32 %s93, 1
        %s162 = smul.addr %s161, 16
        %s163 = scalar_lea.vmem [#allocation2], %s162
        %p164 = scmp.lt.s32.totalorder %s17, 1
        %s165 = scalar_select %p164, %s17, 1
        %s166 = smul.addr %s165, 12
        %s167 = smul.addr %s166, 4
        %s168 = scalar_lea.vmem %s0, %s167
        %v170 = vld [vmem:[%s168] sm:$0xf]
        %v171 = vld [vmem:[%s168 + $0x4] sm:$0xf]
        %v172 = vld [vmem:[%s168 + $0x8] sm:$0x1]
        %v173 = vld [vmem:[%s168 + $0xc] sm:$0xf]
        %v174 = vld [vmem:[%s168 + $0x10] sm:$0xf]
        %v175 = vld [vmem:[%s168 + $0x14] sm:$0x1]
        %v176 = vld [vmem:[%s168 + $0x18] sm:$0xf]
        %v177 = vld [vmem:[%s168 + $0x1c] sm:$0xf]
        %v178 = vld [vmem:[%s168 + $0x20] sm:$0x1]
        %v179 = vld [vmem:[%s168 + $0x24] sm:$0xf]
        %v180 = vld [vmem:[%s168 + $0x28] sm:$0xf]
        %v181 = vld [vmem:[%s168 + $0x2c] sm:$0x1]
        %v184 = vpack.i.b16 %v173, %v170
        %v185 = vshrl.u32 %v170, 16
        %v186 = vshrl.u32 %v173, 16
        %v187 = vpack.i.b16 %v186, %v185
        %v190 = vpack.i.b16 %v179, %v176
        %v191 = vshrl.u32 %v176, 16
        %v192 = vshrl.u32 %v179, 16
        %v193 = vpack.i.b16 %v192, %v191
        %v196 = vpack.i.b16 %v174, %v171
        %v197 = vshrl.u32 %v171, 16
        %v198 = vshrl.u32 %v174, 16
        %v199 = vpack.i.b16 %v198, %v197
        %v202 = vpack.i.b16 %v180, %v177
        %v203 = vshrl.u32 %v177, 16
        %v204 = vshrl.u32 %v180, 16
        %v205 = vpack.i.b16 %v204, %v203
        %v208 = vunpack.c.l.s4 1983009808
        %v209 = vunpack.c.0.s8 %v208
        %v210 = vlaneseq
        %v211 = vshrl.u32 %v210, 7
        %v212 = vsub.s32 %v209, %v211
        %v213 = vrot.slane %v184, %v212
        %v216 = vunpack.c.l.s4 1983009808
        %v217 = vunpack.c.0.s8 %v216
        %v218 = vlaneseq
        %v219 = vshrl.u32 %v218, 7
        %v220 = vsub.s32 %v217, %v219
        %v221 = vrot.slane %v190, %v220
        %v222 = vcombine.low %v213, %v221
        %v223 = vcombine.high %v213, %v221
        %v225 = vunpack.c.l.s4 1934713408
        %v226 = vunpack.c.0.s8 %v225
        %v227 = vlaneseq
        %v228 = vshrl.u32 %v227, 7
        %v229 = vsub.s32 %v226, %v228
        %v230 = vrot.slane %v222, %v229
        %v232 = vunpack.c.l.s4 1934713408
        %v233 = vunpack.c.0.s8 %v232
        %v234 = vlaneseq
        %v235 = vshrl.u32 %v234, 7
        %v236 = vsub.s32 %v233, %v235
        %v237 = vrot.slane %v223, %v236
        %v238 = vcombine.high %v230, 0
        %v239 = vcombine.high %v237, 0
        %v242 = vunpack.c.l.s4 1983009808
        %v243 = vunpack.c.0.s8 %v242
        %v244 = vlaneseq
        %v245 = vshrl.u32 %v244, 7
        %v246 = vsub.s32 %v243, %v245
        %v247 = vrot.slane %v187, %v246
        %v250 = vunpack.c.l.s4 1983009808
        %v251 = vunpack.c.0.s8 %v250
        %v252 = vlaneseq
        %v253 = vshrl.u32 %v252, 7
        %v254 = vsub.s32 %v251, %v253
        %v255 = vrot.slane %v193, %v254
        %v256 = vcombine.low %v247, %v255
        %v257 = vcombine.high %v247, %v255
        %v259 = vunpack.c.l.s4 1934713408
        %v260 = vunpack.c.0.s8 %v259
        %v261 = vlaneseq
        %v262 = vshrl.u32 %v261, 7
        %v263 = vsub.s32 %v260, %v262
        %v264 = vrot.slane %v256, %v263
        %v266 = vunpack.c.l.s4 1934713408
        %v267 = vunpack.c.0.s8 %v266
        %v268 = vlaneseq
        %v269 = vshrl.u32 %v268, 7
        %v270 = vsub.s32 %v267, %v269
        %v271 = vrot.slane %v257, %v270
        %v272 = vcombine.high %v264, 0
        %v273 = vcombine.high %v271, 0
        %v276 = vunpack.c.l.s4 1983009808
        %v277 = vunpack.c.0.s8 %v276
        %v278 = vlaneseq
        %v279 = vshrl.u32 %v278, 7
        %v280 = vsub.s32 %v277, %v279
        %v281 = vrot.slane %v196, %v280
        %v284 = vunpack.c.l.s4 1983009808
        %v285 = vunpack.c.0.s8 %v284
        %v286 = vlaneseq
        %v287 = vshrl.u32 %v286, 7
        %v288 = vsub.s32 %v285, %v287
        %v289 = vrot.slane %v202, %v288
        %v290 = vcombine.low %v281, %v289
        %v291 = vcombine.high %v281, %v289
        %v293 = vunpack.c.l.s4 1934713408
        %v294 = vunpack.c.0.s8 %v293
        %v295 = vlaneseq
        %v296 = vshrl.u32 %v295, 7
        %v297 = vsub.s32 %v294, %v296
        %v298 = vrot.slane %v290, %v297
        %v300 = vunpack.c.l.s4 1934713408
        %v301 = vunpack.c.0.s8 %v300
        %v302 = vlaneseq
        %v303 = vshrl.u32 %v302, 7
        %v304 = vsub.s32 %v301, %v303
        %v305 = vrot.slane %v291, %v304
        %v306 = vcombine.high %v298, 0
        %v307 = vcombine.high %v305, 0
        %v310 = vunpack.c.l.s4 1983009808
        %v311 = vunpack.c.0.s8 %v310
        %v312 = vlaneseq
        %v313 = vshrl.u32 %v312, 7
        %v314 = vsub.s32 %v311, %v313
        %v315 = vrot.slane %v199, %v314
        %v318 = vunpack.c.l.s4 1983009808
        %v319 = vunpack.c.0.s8 %v318
        %v320 = vlaneseq
        %v321 = vshrl.u32 %v320, 7
        %v322 = vsub.s32 %v319, %v321
        %v323 = vrot.slane %v205, %v322
        %v324 = vcombine.low %v315, %v323
        %v325 = vcombine.high %v315, %v323
        %v327 = vunpack.c.l.s4 1934713408
        %v328 = vunpack.c.0.s8 %v327
        %v329 = vlaneseq
        %v330 = vshrl.u32 %v329, 7
        %v331 = vsub.s32 %v328, %v330
        %v332 = vrot.slane %v324, %v331
        %v334 = vunpack.c.l.s4 1934713408
        %v335 = vunpack.c.0.s8 %v334
        %v336 = vlaneseq
        %v337 = vshrl.u32 %v336, 7
        %v338 = vsub.s32 %v335, %v337
        %v339 = vrot.slane %v325, %v338
        %v340 = vcombine.high %v332, 0
        %v341 = vcombine.high %v339, 0
        %v343 = vunpack.c.l.b16 %v264
        %v344 = vpack.c.b16 %v343, %v343
        %345 = vrot.lane.b32.xlu0 %v344, 16
        %v346 = vpop.permute.xlu0 %345
        %v348 = vunpack.c.l.b16 %v238
        %v349 = vpack.c.b16 %v348, %v348
        %350 = vrot.lane.b32.xlu0 %v349, 32
        %v351 = vpop.permute.xlu0 %350
        %v353 = vunpack.c.l.b16 %v272
        %v354 = vpack.c.b16 %v353, %v353
        %355 = vrot.lane.b32.xlu0 %v354, 48
        %v356 = vpop.permute.xlu0 %355
        %v358 = vunpack.c.l.b16 %v237
        %v359 = vpack.c.b16 %v358, %v358
        %360 = vrot.lane.b32.xlu0 %v359, 64
        %v361 = vpop.permute.xlu0 %360
        %v363 = vunpack.c.l.b16 %v271
        %v364 = vpack.c.b16 %v363, %v363
        %365 = vrot.lane.b32.xlu0 %v364, 80
        %v366 = vpop.permute.xlu0 %365
        %v368 = vunpack.c.l.b16 %v239
        %v369 = vpack.c.b16 %v368, %v368
        %370 = vrot.lane.b32.xlu0 %v369, 96
        %v371 = vpop.permute.xlu0 %370
        %v373 = vunpack.c.l.b16 %v273
        %v374 = vpack.c.b16 %v373, %v373
        %375 = vrot.lane.b32.xlu0 %v374, 112
        %v376 = vpop.permute.xlu0 %375
        %v378 = vunpack.c.l.b16 %v332
        %v379 = vpack.c.b16 %v378, %v378
        %380 = vrot.lane.b32.xlu0 %v379, 16
        %v381 = vpop.permute.xlu0 %380
        %v383 = vunpack.c.l.b16 %v306
        %v384 = vpack.c.b16 %v383, %v383
        %385 = vrot.lane.b32.xlu0 %v384, 32
        %v386 = vpop.permute.xlu0 %385
        %v388 = vunpack.c.l.b16 %v340
        %v389 = vpack.c.b16 %v388, %v388
        %390 = vrot.lane.b32.xlu0 %v389, 48
        %v391 = vpop.permute.xlu0 %390
        %v393 = vunpack.c.l.b16 %v305
        %v394 = vpack.c.b16 %v393, %v393
        %395 = vrot.lane.b32.xlu0 %v394, 64
        %v396 = vpop.permute.xlu0 %395
        %v398 = vunpack.c.l.b16 %v339
        %v399 = vpack.c.b16 %v398, %v398
        %400 = vrot.lane.b32.xlu0 %v399, 80
        %v401 = vpop.permute.xlu0 %400
        %v403 = vunpack.c.l.b16 %v307
        %v404 = vpack.c.b16 %v403, %v403
        %405 = vrot.lane.b32.xlu0 %v404, 96
        %v406 = vpop.permute.xlu0 %405
        %v408 = vunpack.c.l.b16 %v341
        %v409 = vpack.c.b16 %v408, %v408
        %410 = vrot.lane.b32.xlu0 %v409, 112
        %v411 = vpop.permute.xlu0 %410
        %vm412 = vcmask 130048
        %v415 = vsel %vm412, %v230, %v346
        %vm416 = vcmask 261120
        %v418 = vsel %vm416, %v415, %v351
        %vm419 = vcmask 392192
        %v421 = vsel %vm419, %v418, %v356
        %vm422 = vcmask 523264
        %v424 = vsel %vm422, %v421, %v361
        %vm425 = vcmask 654336
        %v427 = vsel %vm425, %v424, %v366
        %vm428 = vcmask 785408
        %v430 = vsel %vm428, %v427, %v371
        %vm431 = vcmask 916480
        %v433 = vsel %vm431, %v430, %v376
        %v436 = vsel %vm412, %v298, %v381
        %v438 = vsel %vm416, %v436, %v386
        %v440 = vsel %vm419, %v438, %v391
        %v442 = vsel %vm422, %v440, %v396
        %v444 = vsel %vm425, %v442, %v401
        %v446 = vsel %vm428, %v444, %v406
        %v448 = vsel %vm431, %v446, %v411
        %457 = vrot.lane.b32.xlu0 %v170, 127
        %v458 = vpop.permute.xlu0 %457
        %459 = vrot.lane.b32.xlu0 %v171, 127
        %v460 = vpop.permute.xlu0 %459
        %461 = vrot.lane.b32.xlu0 %v173, 127
        %v462 = vpop.permute.xlu0 %461
        %463 = vrot.lane.b32.xlu0 %v174, 127
        %v464 = vpop.permute.xlu0 %463
        %465 = vrot.lane.b32.xlu0 %v176, 127
        %v466 = vpop.permute.xlu0 %465
        %467 = vrot.lane.b32.xlu0 %v177, 127
        %v468 = vpop.permute.xlu0 %467
        %469 = vrot.lane.b32.xlu0 %v179, 127
        %v470 = vpop.permute.xlu0 %469
        %471 = vrot.lane.b32.xlu0 %v180, 127
        %v472 = vpop.permute.xlu0 %471
        %v475 = vpack.i.b16 %v462, %v458
        %v476 = vshrl.u32 %v458, 16
        %v477 = vshrl.u32 %v462, 16
        %v478 = vpack.i.b16 %v477, %v476
        %v481 = vpack.i.b16 %v470, %v466
        %v482 = vshrl.u32 %v466, 16
        %v483 = vshrl.u32 %v470, 16
        %v484 = vpack.i.b16 %v483, %v482
        %v487 = vpack.i.b16 %v464, %v460
        %v488 = vshrl.u32 %v460, 16
        %v489 = vshrl.u32 %v464, 16
        %v490 = vpack.i.b16 %v489, %v488
        %v493 = vpack.i.b16 %v472, %v468
        %v494 = vshrl.u32 %v468, 16
        %v495 = vshrl.u32 %v472, 16
        %v496 = vpack.i.b16 %v495, %v494
        %v499 = vunpack.c.l.s4 1983009808
        %v500 = vunpack.c.0.s8 %v499
        %v501 = vlaneseq
        %v502 = vshrl.u32 %v501, 7
        %v503 = vsub.s32 %v500, %v502
        %v504 = vrot.slane %v475, %v503
        %v507 = vunpack.c.l.s4 1983009808
        %v508 = vunpack.c.0.s8 %v507
        %v509 = vlaneseq
        %v510 = vshrl.u32 %v509, 7
        %v511 = vsub.s32 %v508, %v510
        %v512 = vrot.slane %v481, %v511
        %v513 = vcombine.low %v504, %v512
        %v514 = vcombine.high %v504, %v512
        %v516 = vunpack.c.l.s4 1934713408
        %v517 = vunpack.c.0.s8 %v516
        %v518 = vlaneseq
        %v519 = vshrl.u32 %v518, 7
        %v520 = vsub.s32 %v517, %v519
        %v521 = vrot.slane %v513, %v520
        %v523 = vunpack.c.l.s4 1934713408
        %v524 = vunpack.c.0.s8 %v523
        %v525 = vlaneseq
        %v526 = vshrl.u32 %v525, 7
        %v527 = vsub.s32 %v524, %v526
        %v528 = vrot.slane %v514, %v527
        %v529 = vcombine.high %v521, 0
        %v530 = vcombine.high %v528, 0
        %v533 = vunpack.c.l.s4 1983009808
        %v534 = vunpack.c.0.s8 %v533
        %v535 = vlaneseq
        %v536 = vshrl.u32 %v535, 7
        %v537 = vsub.s32 %v534, %v536
        %v538 = vrot.slane %v478, %v537
        %v541 = vunpack.c.l.s4 1983009808
        %v542 = vunpack.c.0.s8 %v541
        %v543 = vlaneseq
        %v544 = vshrl.u32 %v543, 7
        %v545 = vsub.s32 %v542, %v544
        %v546 = vrot.slane %v484, %v545
        %v547 = vcombine.low %v538, %v546
        %v548 = vcombine.high %v538, %v546
        %v550 = vunpack.c.l.s4 1934713408
        %v551 = vunpack.c.0.s8 %v550
        %v552 = vlaneseq
        %v553 = vshrl.u32 %v552, 7
        %v554 = vsub.s32 %v551, %v553
        %v555 = vrot.slane %v547, %v554
        %v557 = vunpack.c.l.s4 1934713408
        %v558 = vunpack.c.0.s8 %v557
        %v559 = vlaneseq
        %v560 = vshrl.u32 %v559, 7
        %v561 = vsub.s32 %v558, %v560
        %v562 = vrot.slane %v548, %v561
        %v563 = vcombine.high %v555, 0
        %v564 = vcombine.high %v562, 0
        %v567 = vunpack.c.l.s4 1983009808
        %v568 = vunpack.c.0.s8 %v567
        %v569 = vlaneseq
        %v570 = vshrl.u32 %v569, 7
        %v571 = vsub.s32 %v568, %v570
        %v572 = vrot.slane %v487, %v571
        %v575 = vunpack.c.l.s4 1983009808
        %v576 = vunpack.c.0.s8 %v575
        %v577 = vlaneseq
        %v578 = vshrl.u32 %v577, 7
        %v579 = vsub.s32 %v576, %v578
        %v580 = vrot.slane %v493, %v579
        %v581 = vcombine.low %v572, %v580
        %v582 = vcombine.high %v572, %v580
        %v584 = vunpack.c.l.s4 1934713408
        %v585 = vunpack.c.0.s8 %v584
        %v586 = vlaneseq
        %v587 = vshrl.u32 %v586, 7
        %v588 = vsub.s32 %v585, %v587
        %v589 = vrot.slane %v581, %v588
        %v591 = vunpack.c.l.s4 1934713408
        %v592 = vunpack.c.0.s8 %v591
        %v593 = vlaneseq
        %v594 = vshrl.u32 %v593, 7
        %v595 = vsub.s32 %v592, %v594
        %v596 = vrot.slane %v582, %v595
        %v597 = vcombine.high %v589, 0
        %v598 = vcombine.high %v596, 0
        %v601 = vunpack.c.l.s4 1983009808
        %v602 = vunpack.c.0.s8 %v601
        %v603 = vlaneseq
        %v604 = vshrl.u32 %v603, 7
        %v605 = vsub.s32 %v602, %v604
        %v606 = vrot.slane %v490, %v605
        %v609 = vunpack.c.l.s4 1983009808
        %v610 = vunpack.c.0.s8 %v609
        %v611 = vlaneseq
        %v612 = vshrl.u32 %v611, 7
        %v613 = vsub.s32 %v610, %v612
        %v614 = vrot.slane %v496, %v613
        %v615 = vcombine.low %v606, %v614
        %v616 = vcombine.high %v606, %v614
        %v618 = vunpack.c.l.s4 1934713408
        %v619 = vunpack.c.0.s8 %v618
        %v620 = vlaneseq
        %v621 = vshrl.u32 %v620, 7
        %v622 = vsub.s32 %v619, %v621
        %v623 = vrot.slane %v615, %v622
        %v625 = vunpack.c.l.s4 1934713408
        %v626 = vunpack.c.0.s8 %v625
        %v627 = vlaneseq
        %v628 = vshrl.u32 %v627, 7
        %v629 = vsub.s32 %v626, %v628
        %v630 = vrot.slane %v616, %v629
        %v631 = vcombine.high %v623, 0
        %v632 = vcombine.high %v630, 0
        %v634 = vunpack.c.l.b16 %v555
        %v635 = vpack.c.b16 %v634, %v634
        %636 = vrot.lane.b32.xlu0 %v635, 16
        %v637 = vpop.permute.xlu0 %636
        %v639 = vunpack.c.l.b16 %v529
        %v640 = vpack.c.b16 %v639, %v639
        %641 = vrot.lane.b32.xlu0 %v640, 32
        %v642 = vpop.permute.xlu0 %641
        %v644 = vunpack.c.l.b16 %v563
        %v645 = vpack.c.b16 %v644, %v644
        %646 = vrot.lane.b32.xlu0 %v645, 48
        %v647 = vpop.permute.xlu0 %646
        %v649 = vunpack.c.l.b16 %v528
        %v650 = vpack.c.b16 %v649, %v649
        %651 = vrot.lane.b32.xlu0 %v650, 64
        %v652 = vpop.permute.xlu0 %651
        %v654 = vunpack.c.l.b16 %v562
        %v655 = vpack.c.b16 %v654, %v654
        %656 = vrot.lane.b32.xlu0 %v655, 80
        %v657 = vpop.permute.xlu0 %656
        %v659 = vunpack.c.l.b16 %v530
        %v660 = vpack.c.b16 %v659, %v659
        %661 = vrot.lane.b32.xlu0 %v660, 96
        %v662 = vpop.permute.xlu0 %661
        %v664 = vunpack.c.l.b16 %v564
        %v665 = vpack.c.b16 %v664, %v664
        %666 = vrot.lane.b32.xlu0 %v665, 112
        %v667 = vpop.permute.xlu0 %666
        %v669 = vunpack.c.l.b16 %v623
        %v670 = vpack.c.b16 %v669, %v669
        %671 = vrot.lane.b32.xlu0 %v670, 16
        %v672 = vpop.permute.xlu0 %671
        %v674 = vunpack.c.l.b16 %v597
        %v675 = vpack.c.b16 %v674, %v674
        %676 = vrot.lane.b32.xlu0 %v675, 32
        %v677 = vpop.permute.xlu0 %676
        %v679 = vunpack.c.l.b16 %v631
        %v680 = vpack.c.b16 %v679, %v679
        %681 = vrot.lane.b32.xlu0 %v680, 48
        %v682 = vpop.permute.xlu0 %681
        %v684 = vunpack.c.l.b16 %v596
        %v685 = vpack.c.b16 %v684, %v684
        %686 = vrot.lane.b32.xlu0 %v685, 64
        %v687 = vpop.permute.xlu0 %686
        %v689 = vunpack.c.l.b16 %v630
        %v690 = vpack.c.b16 %v689, %v689
        %691 = vrot.lane.b32.xlu0 %v690, 80
        %v692 = vpop.permute.xlu0 %691
        %v694 = vunpack.c.l.b16 %v598
        %v695 = vpack.c.b16 %v694, %v694
        %696 = vrot.lane.b32.xlu0 %v695, 96
        %v697 = vpop.permute.xlu0 %696
        %v699 = vunpack.c.l.b16 %v632
        %v700 = vpack.c.b16 %v699, %v699
        %701 = vrot.lane.b32.xlu0 %v700, 112
        %v702 = vpop.permute.xlu0 %701
        %v705 = vsel %vm412, %v521, %v637
        %v707 = vsel %vm416, %v705, %v642
        %v709 = vsel %vm419, %v707, %v647
        %v711 = vsel %vm422, %v709, %v652
        %v713 = vsel %vm425, %v711, %v657
        %v715 = vsel %vm428, %v713, %v662
        %v717 = vsel %vm431, %v715, %v667
        %v720 = vsel %vm412, %v589, %v672
        %v722 = vsel %vm416, %v720, %v677
        %v724 = vsel %vm419, %v722, %v682
        %v726 = vsel %vm422, %v724, %v687
        %v728 = vsel %vm425, %v726, %v692
        %v730 = vsel %vm428, %v728, %v697
        %v732 = vsel %vm431, %v730, %v702
        %733 = vrot.lane.b32.xlu0 %v170, 126
        %v734 = vpop.permute.xlu0 %733
        %735 = vrot.lane.b32.xlu0 %v171, 126
        %v736 = vpop.permute.xlu0 %735
        %737 = vrot.lane.b32.xlu0 %v173, 126
        %v738 = vpop.permute.xlu0 %737
        %739 = vrot.lane.b32.xlu0 %v174, 126
        %v740 = vpop.permute.xlu0 %739
        %741 = vrot.lane.b32.xlu0 %v176, 126
        %v742 = vpop.permute.xlu0 %741
        %743 = vrot.lane.b32.xlu0 %v177, 126
        %v744 = vpop.permute.xlu0 %743
        %745 = vrot.lane.b32.xlu0 %v179, 126
        %v746 = vpop.permute.xlu0 %745
        %747 = vrot.lane.b32.xlu0 %v180, 126
        %v748 = vpop.permute.xlu0 %747
        %v751 = vpack.i.b16 %v738, %v734
        %v752 = vshrl.u32 %v734, 16
        %v753 = vshrl.u32 %v738, 16
        %v754 = vpack.i.b16 %v753, %v752
        %v757 = vpack.i.b16 %v746, %v742
        %v758 = vshrl.u32 %v742, 16
        %v759 = vshrl.u32 %v746, 16
        %v760 = vpack.i.b16 %v759, %v758
        %v763 = vpack.i.b16 %v740, %v736
        %v764 = vshrl.u32 %v736, 16
        %v765 = vshrl.u32 %v740, 16
        %v766 = vpack.i.b16 %v765, %v764
        %v769 = vpack.i.b16 %v748, %v744
        %v770 = vshrl.u32 %v744, 16
        %v771 = vshrl.u32 %v748, 16
        %v772 = vpack.i.b16 %v771, %v770
        %v775 = vunpack.c.l.s4 1983009808
        %v776 = vunpack.c.0.s8 %v775
        %v777 = vlaneseq
        %v778 = vshrl.u32 %v777, 7
        %v779 = vsub.s32 %v776, %v778
        %v780 = vrot.slane %v751, %v779
        %v783 = vunpack.c.l.s4 1983009808
        %v784 = vunpack.c.0.s8 %v783
        %v785 = vlaneseq
        %v786 = vshrl.u32 %v785, 7
        %v787 = vsub.s32 %v784, %v786
        %v788 = vrot.slane %v757, %v787
        %v789 = vcombine.low %v780, %v788
        %v790 = vcombine.high %v780, %v788
        %v792 = vunpack.c.l.s4 1934713408
        %v793 = vunpack.c.0.s8 %v792
        %v794 = vlaneseq
        %v795 = vshrl.u32 %v794, 7
        %v796 = vsub.s32 %v793, %v795
        %v797 = vrot.slane %v789, %v796
        %v799 = vunpack.c.l.s4 1934713408
        %v800 = vunpack.c.0.s8 %v799
        %v801 = vlaneseq
        %v802 = vshrl.u32 %v801, 7
        %v803 = vsub.s32 %v800, %v802
        %v804 = vrot.slane %v790, %v803
        %v805 = vcombine.high %v797, 0
        %v806 = vcombine.high %v804, 0
        %v809 = vunpack.c.l.s4 1983009808
        %v810 = vunpack.c.0.s8 %v809
        %v811 = vlaneseq
        %v812 = vshrl.u32 %v811, 7
        %v813 = vsub.s32 %v810, %v812
        %v814 = vrot.slane %v754, %v813
        %v817 = vunpack.c.l.s4 1983009808
        %v818 = vunpack.c.0.s8 %v817
        %v819 = vlaneseq
        %v820 = vshrl.u32 %v819, 7
        %v821 = vsub.s32 %v818, %v820
        %v822 = vrot.slane %v760, %v821
        %v823 = vcombine.low %v814, %v822
        %v824 = vcombine.high %v814, %v822
        %v826 = vunpack.c.l.s4 1934713408
        %v827 = vunpack.c.0.s8 %v826
        %v828 = vlaneseq
        %v829 = vshrl.u32 %v828, 7
        %v830 = vsub.s32 %v827, %v829
        %v831 = vrot.slane %v823, %v830
        %v833 = vunpack.c.l.s4 1934713408
        %v834 = vunpack.c.0.s8 %v833
        %v835 = vlaneseq
        %v836 = vshrl.u32 %v835, 7
        %v837 = vsub.s32 %v834, %v836
        %v838 = vrot.slane %v824, %v837
        %v839 = vcombine.high %v831, 0
        %v840 = vcombine.high %v838, 0
        %v843 = vunpack.c.l.s4 1983009808
        %v844 = vunpack.c.0.s8 %v843
        %v845 = vlaneseq
        %v846 = vshrl.u32 %v845, 7
        %v847 = vsub.s32 %v844, %v846
        %v848 = vrot.slane %v763, %v847
        %v851 = vunpack.c.l.s4 1983009808
        %v852 = vunpack.c.0.s8 %v851
        %v853 = vlaneseq
        %v854 = vshrl.u32 %v853, 7
        %v855 = vsub.s32 %v852, %v854
        %v856 = vrot.slane %v769, %v855
        %v857 = vcombine.low %v848, %v856
        %v858 = vcombine.high %v848, %v856
        %v860 = vunpack.c.l.s4 1934713408
        %v861 = vunpack.c.0.s8 %v860
        %v862 = vlaneseq
        %v863 = vshrl.u32 %v862, 7
        %v864 = vsub.s32 %v861, %v863
        %v865 = vrot.slane %v857, %v864
        %v867 = vunpack.c.l.s4 1934713408
        %v868 = vunpack.c.0.s8 %v867
        %v869 = vlaneseq
        %v870 = vshrl.u32 %v869, 7
        %v871 = vsub.s32 %v868, %v870
        %v872 = vrot.slane %v858, %v871
        %v873 = vcombine.high %v865, 0
        %v874 = vcombine.high %v872, 0
        %v877 = vunpack.c.l.s4 1983009808
        %v878 = vunpack.c.0.s8 %v877
        %v879 = vlaneseq
        %v880 = vshrl.u32 %v879, 7
        %v881 = vsub.s32 %v878, %v880
        %v882 = vrot.slane %v766, %v881
        %v885 = vunpack.c.l.s4 1983009808
        %v886 = vunpack.c.0.s8 %v885
        %v887 = vlaneseq
        %v888 = vshrl.u32 %v887, 7
        %v889 = vsub.s32 %v886, %v888
        %v890 = vrot.slane %v772, %v889
        %v891 = vcombine.low %v882, %v890
        %v892 = vcombine.high %v882, %v890
        %v894 = vunpack.c.l.s4 1934713408
        %v895 = vunpack.c.0.s8 %v894
        %v896 = vlaneseq
        %v897 = vshrl.u32 %v896, 7
        %v898 = vsub.s32 %v895, %v897
        %v899 = vrot.slane %v891, %v898
        %v901 = vunpack.c.l.s4 1934713408
        %v902 = vunpack.c.0.s8 %v901
        %v903 = vlaneseq
        %v904 = vshrl.u32 %v903, 7
        %v905 = vsub.s32 %v902, %v904
        %v906 = vrot.slane %v892, %v905
        %v907 = vcombine.high %v899, 0
        %v908 = vcombine.high %v906, 0
        %v910 = vunpack.c.l.b16 %v831
        %v911 = vpack.c.b16 %v910, %v910
        %912 = vrot.lane.b32.xlu0 %v911, 16
        %v913 = vpop.permute.xlu0 %912
        %v915 = vunpack.c.l.b16 %v805
        %v916 = vpack.c.b16 %v915, %v915
        %917 = vrot.lane.b32.xlu0 %v916, 32
        %v918 = vpop.permute.xlu0 %917
        %v920 = vunpack.c.l.b16 %v839
        %v921 = vpack.c.b16 %v920, %v920
        %922 = vrot.lane.b32.xlu0 %v921, 48
        %v923 = vpop.permute.xlu0 %922
        %v925 = vunpack.c.l.b16 %v804
        %v926 = vpack.c.b16 %v925, %v925
        %927 = vrot.lane.b32.xlu0 %v926, 64
        %v928 = vpop.permute.xlu0 %927
        %v930 = vunpack.c.l.b16 %v838
        %v931 = vpack.c.b16 %v930, %v930
        %932 = vrot.lane.b32.xlu0 %v931, 80
        %v933 = vpop.permute.xlu0 %932
        %v935 = vunpack.c.l.b16 %v806
        %v936 = vpack.c.b16 %v935, %v935
        %937 = vrot.lane.b32.xlu0 %v936, 96
        %v938 = vpop.permute.xlu0 %937
        %v940 = vunpack.c.l.b16 %v840
        %v941 = vpack.c.b16 %v940, %v940
        %942 = vrot.lane.b32.xlu0 %v941, 112
        %v943 = vpop.permute.xlu0 %942
        %v945 = vunpack.c.l.b16 %v899
        %v946 = vpack.c.b16 %v945, %v945
        %947 = vrot.lane.b32.xlu0 %v946, 16
        %v948 = vpop.permute.xlu0 %947
        %v950 = vunpack.c.l.b16 %v873
        %v951 = vpack.c.b16 %v950, %v950
        %952 = vrot.lane.b32.xlu0 %v951, 32
        %v953 = vpop.permute.xlu0 %952
        %v955 = vunpack.c.l.b16 %v907
        %v956 = vpack.c.b16 %v955, %v955
        %957 = vrot.lane.b32.xlu0 %v956, 48
        %v958 = vpop.permute.xlu0 %957
        %v960 = vunpack.c.l.b16 %v872
        %v961 = vpack.c.b16 %v960, %v960
        %962 = vrot.lane.b32.xlu0 %v961, 64
        %v963 = vpop.permute.xlu0 %962
        %v965 = vunpack.c.l.b16 %v906
        %v966 = vpack.c.b16 %v965, %v965
        %967 = vrot.lane.b32.xlu0 %v966, 80
        %v968 = vpop.permute.xlu0 %967
        %v970 = vunpack.c.l.b16 %v874
        %v971 = vpack.c.b16 %v970, %v970
        %972 = vrot.lane.b32.xlu0 %v971, 96
        %v973 = vpop.permute.xlu0 %972
        %v975 = vunpack.c.l.b16 %v908
        %v976 = vpack.c.b16 %v975, %v975
        %977 = vrot.lane.b32.xlu0 %v976, 112
        %v978 = vpop.permute.xlu0 %977
        %v981 = vsel %vm412, %v797, %v913
        %v983 = vsel %vm416, %v981, %v918
        %v985 = vsel %vm419, %v983, %v923
        %v987 = vsel %vm422, %v985, %v928
        %v989 = vsel %vm425, %v987, %v933
        %v991 = vsel %vm428, %v989, %v938
        %v993 = vsel %vm431, %v991, %v943
        %v996 = vsel %vm412, %v865, %v948
        %v998 = vsel %vm416, %v996, %v953
        %v1000 = vsel %vm419, %v998, %v958
        %v1002 = vsel %vm422, %v1000, %v963
        %v1004 = vsel %vm425, %v1002, %v968
        %v1006 = vsel %vm428, %v1004, %v973
        %v1008 = vsel %vm431, %v1006, %v978
        %vm1009 = vsmask.f32 3328
        %vm1010 = vsmask.f32 7440
        %vm1011 = vmor %vm1009, %vm1010
        %v1013 = vrot.slane %v185, 4
        %v1014 = vshll.u32 %v170, 16
        %v1016 = vrot.slane %v1014, 5
        %v1017 = vor.u32 %v1013, %v1016
        %v1018 = vrot.slane %v1017, 4
        %v1019 = vshll.u32 %v171, 16
        %v1021 = vrot.slane %v1019, 5
        %v1022 = vsel %vm1011, %v1018, %v1021
        %v1024 = vrot.slane %v197, 4
        %v1025 = vor.u32 %v1024, %v1021
        %v1026 = vrot.slane %v1025, 4
        %v1028 = vshll.u32 %v172, 16
        %v1030 = vrot.slane %v1028, 5
        %v1031 = vsel %vm1011, %v1026, %v1030
        %v1033 = vrot.slane %v186, 4
        %v1034 = vshll.u32 %v173, 16
        %v1036 = vrot.slane %v1034, 5
        %v1037 = vor.u32 %v1033, %v1036
        %v1038 = vrot.slane %v1037, 4
        %v1039 = vshll.u32 %v174, 16
        %v1041 = vrot.slane %v1039, 5
        %v1042 = vsel %vm1011, %v1038, %v1041
        %v1044 = vrot.slane %v198, 4
        %v1045 = vor.u32 %v1044, %v1041
        %v1046 = vrot.slane %v1045, 4
        %v1048 = vshll.u32 %v175, 16
        %v1050 = vrot.slane %v1048, 5
        %v1051 = vsel %vm1011, %v1046, %v1050
        %v1053 = vrot.slane %v191, 4
        %v1054 = vshll.u32 %v176, 16
        %v1056 = vrot.slane %v1054, 5
        %v1057 = vor.u32 %v1053, %v1056
        %v1058 = vrot.slane %v1057, 4
        %v1059 = vshll.u32 %v177, 16
        %v1061 = vrot.slane %v1059, 5
        %v1062 = vsel %vm1011, %v1058, %v1061
        %v1064 = vrot.slane %v203, 4
        %v1065 = vor.u32 %v1064, %v1061
        %v1066 = vrot.slane %v1065, 4
        %v1068 = vshll.u32 %v178, 16
        %v1070 = vrot.slane %v1068, 5
        %v1071 = vsel %vm1011, %v1066, %v1070
        %v1073 = vrot.slane %v192, 4
        %v1074 = vshll.u32 %v179, 16
        %v1076 = vrot.slane %v1074, 5
        %v1077 = vor.u32 %v1073, %v1076
        %v1078 = vrot.slane %v1077, 4
        %v1079 = vshll.u32 %v180, 16
        %v1081 = vrot.slane %v1079, 5
        %v1082 = vsel %vm1011, %v1078, %v1081
        %v1084 = vrot.slane %v204, 4
        %v1085 = vor.u32 %v1084, %v1081
        %v1086 = vrot.slane %v1085, 4
        %v1088 = vshll.u32 %v181, 16
        %v1090 = vrot.slane %v1088, 5
        %v1091 = vsel %vm1011, %v1086, %v1090
        %v1094 = vpack.i.b16 %v1042, %v1022
        %v1095 = vshrl.u32 %v1022, 16
        %v1096 = vshrl.u32 %v1042, 16
        %v1097 = vpack.i.b16 %v1096, %v1095
        %v1100 = vpack.i.b16 %v1082, %v1062
        %v1101 = vshrl.u32 %v1062, 16
        %v1102 = vshrl.u32 %v1082, 16
        %v1103 = vpack.i.b16 %v1102, %v1101
        %v1106 = vpack.i.b16 %v1051, %v1031
        %v1107 = vshrl.u32 %v1031, 16
        %v1108 = vshrl.u32 %v1051, 16
        %v1109 = vpack.i.b16 %v1108, %v1107
        %v1112 = vpack.i.b16 %v1091, %v1071
        %v1113 = vshrl.u32 %v1071, 16
        %v1114 = vshrl.u32 %v1091, 16
        %v1115 = vpack.i.b16 %v1114, %v1113
        %v1118 = vunpack.c.l.s4 1983009808
        %v1119 = vunpack.c.0.s8 %v1118
        %v1120 = vlaneseq
        %v1121 = vshrl.u32 %v1120, 7
        %v1122 = vsub.s32 %v1119, %v1121
        %v1123 = vrot.slane %v1094, %v1122
        %v1126 = vunpack.c.l.s4 1983009808
        %v1127 = vunpack.c.0.s8 %v1126
        %v1128 = vlaneseq
        %v1129 = vshrl.u32 %v1128, 7
        %v1130 = vsub.s32 %v1127, %v1129
        %v1131 = vrot.slane %v1100, %v1130
        %v1132 = vcombine.low %v1123, %v1131
        %v1133 = vcombine.high %v1123, %v1131
        %v1135 = vunpack.c.l.s4 1934713408
        %v1136 = vunpack.c.0.s8 %v1135
        %v1137 = vlaneseq
        %v1138 = vshrl.u32 %v1137, 7
        %v1139 = vsub.s32 %v1136, %v1138
        %v1140 = vrot.slane %v1132, %v1139
        %v1142 = vunpack.c.l.s4 1934713408
        %v1143 = vunpack.c.0.s8 %v1142
        %v1144 = vlaneseq
        %v1145 = vshrl.u32 %v1144, 7
        %v1146 = vsub.s32 %v1143, %v1145
        %v1147 = vrot.slane %v1133, %v1146
        %v1148 = vcombine.high %v1140, 0
        %v1149 = vcombine.high %v1147, 0
        %v1152 = vunpack.c.l.s4 1983009808
        %v1153 = vunpack.c.0.s8 %v1152
        %v1154 = vlaneseq
        %v1155 = vshrl.u32 %v1154, 7
        %v1156 = vsub.s32 %v1153, %v1155
        %v1157 = vrot.slane %v1097, %v1156
        %v1160 = vunpack.c.l.s4 1983009808
        %v1161 = vunpack.c.0.s8 %v1160
        %v1162 = vlaneseq
        %v1163 = vshrl.u32 %v1162, 7
        %v1164 = vsub.s32 %v1161, %v1163
        %v1165 = vrot.slane %v1103, %v1164
        %v1166 = vcombine.low %v1157, %v1165
        %v1167 = vcombine.high %v1157, %v1165
        %v1169 = vunpack.c.l.s4 1934713408
        %v1170 = vunpack.c.0.s8 %v1169
        %v1171 = vlaneseq
        %v1172 = vshrl.u32 %v1171, 7
        %v1173 = vsub.s32 %v1170, %v1172
        %v1174 = vrot.slane %v1166, %v1173
        %v1176 = vunpack.c.l.s4 1934713408
        %v1177 = vunpack.c.0.s8 %v1176
        %v1178 = vlaneseq
        %v1179 = vshrl.u32 %v1178, 7
        %v1180 = vsub.s32 %v1177, %v1179
        %v1181 = vrot.slane %v1167, %v1180
        %v1182 = vcombine.high %v1174, 0
        %v1183 = vcombine.high %v1181, 0
        %v1186 = vunpack.c.l.s4 1983009808
        %v1187 = vunpack.c.0.s8 %v1186
        %v1188 = vlaneseq
        %v1189 = vshrl.u32 %v1188, 7
        %v1190 = vsub.s32 %v1187, %v1189
        %v1191 = vrot.slane %v1106, %v1190
        %v1194 = vunpack.c.l.s4 1983009808
        %v1195 = vunpack.c.0.s8 %v1194
        %v1196 = vlaneseq
        %v1197 = vshrl.u32 %v1196, 7
        %v1198 = vsub.s32 %v1195, %v1197
        %v1199 = vrot.slane %v1112, %v1198
        %v1200 = vcombine.low %v1191, %v1199
        %v1201 = vcombine.high %v1191, %v1199
        %v1203 = vunpack.c.l.s4 1934713408
        %v1204 = vunpack.c.0.s8 %v1203
        %v1205 = vlaneseq
        %v1206 = vshrl.u32 %v1205, 7
        %v1207 = vsub.s32 %v1204, %v1206
        %v1208 = vrot.slane %v1200, %v1207
        %v1210 = vunpack.c.l.s4 1934713408
        %v1211 = vunpack.c.0.s8 %v1210
        %v1212 = vlaneseq
        %v1213 = vshrl.u32 %v1212, 7
        %v1214 = vsub.s32 %v1211, %v1213
        %v1215 = vrot.slane %v1201, %v1214
        %v1216 = vcombine.high %v1208, 0
        %v1217 = vcombine.high %v1215, 0
        %v1220 = vunpack.c.l.s4 1983009808
        %v1221 = vunpack.c.0.s8 %v1220
        %v1222 = vlaneseq
        %v1223 = vshrl.u32 %v1222, 7
        %v1224 = vsub.s32 %v1221, %v1223
        %v1225 = vrot.slane %v1109, %v1224
        %v1228 = vunpack.c.l.s4 1983009808
        %v1229 = vunpack.c.0.s8 %v1228
        %v1230 = vlaneseq
        %v1231 = vshrl.u32 %v1230, 7
        %v1232 = vsub.s32 %v1229, %v1231
        %v1233 = vrot.slane %v1115, %v1232
        %v1234 = vcombine.low %v1225, %v1233
        %v1235 = vcombine.high %v1225, %v1233
        %v1237 = vunpack.c.l.s4 1934713408
        %v1238 = vunpack.c.0.s8 %v1237
        %v1239 = vlaneseq
        %v1240 = vshrl.u32 %v1239, 7
        %v1241 = vsub.s32 %v1238, %v1240
        %v1242 = vrot.slane %v1234, %v1241
        %v1244 = vunpack.c.l.s4 1934713408
        %v1245 = vunpack.c.0.s8 %v1244
        %v1246 = vlaneseq
        %v1247 = vshrl.u32 %v1246, 7
        %v1248 = vsub.s32 %v1245, %v1247
        %v1249 = vrot.slane %v1235, %v1248
        %v1250 = vcombine.high %v1242, 0
        %v1251 = vcombine.high %v1249, 0
        %v1253 = vunpack.c.l.b16 %v1174
        %v1254 = vpack.c.b16 %v1253, %v1253
        %1255 = vrot.lane.b32.xlu0 %v1254, 16
        %v1256 = vpop.permute.xlu0 %1255
        %v1258 = vunpack.c.l.b16 %v1148
        %v1259 = vpack.c.b16 %v1258, %v1258
        %1260 = vrot.lane.b32.xlu0 %v1259, 32
        %v1261 = vpop.permute.xlu0 %1260
        %v1263 = vunpack.c.l.b16 %v1182
        %v1264 = vpack.c.b16 %v1263, %v1263
        %1265 = vrot.lane.b32.xlu0 %v1264, 48
        %v1266 = vpop.permute.xlu0 %1265
        %v1268 = vunpack.c.l.b16 %v1147
        %v1269 = vpack.c.b16 %v1268, %v1268
        %1270 = vrot.lane.b32.xlu0 %v1269, 64
        %v1271 = vpop.permute.xlu0 %1270
        %v1273 = vunpack.c.l.b16 %v1181
        %v1274 = vpack.c.b16 %v1273, %v1273
        %1275 = vrot.lane.b32.xlu0 %v1274, 80
        %v1276 = vpop.permute.xlu0 %1275
        %v1278 = vunpack.c.l.b16 %v1149
        %v1279 = vpack.c.b16 %v1278, %v1278
        %1280 = vrot.lane.b32.xlu0 %v1279, 96
        %v1281 = vpop.permute.xlu0 %1280
        %v1283 = vunpack.c.l.b16 %v1183
        %v1284 = vpack.c.b16 %v1283, %v1283
        %1285 = vrot.lane.b32.xlu0 %v1284, 112
        %v1286 = vpop.permute.xlu0 %1285
        %v1288 = vunpack.c.l.b16 %v1242
        %v1289 = vpack.c.b16 %v1288, %v1288
        %1290 = vrot.lane.b32.xlu0 %v1289, 16
        %v1291 = vpop.permute.xlu0 %1290
        %v1293 = vunpack.c.l.b16 %v1216
        %v1294 = vpack.c.b16 %v1293, %v1293
        %1295 = vrot.lane.b32.xlu0 %v1294, 32
        %v1296 = vpop.permute.xlu0 %1295
        %v1298 = vunpack.c.l.b16 %v1250
        %v1299 = vpack.c.b16 %v1298, %v1298
        %1300 = vrot.lane.b32.xlu0 %v1299, 48
        %v1301 = vpop.permute.xlu0 %1300
        %v1303 = vunpack.c.l.b16 %v1215
        %v1304 = vpack.c.b16 %v1303, %v1303
        %1305 = vrot.lane.b32.xlu0 %v1304, 64
        %v1306 = vpop.permute.xlu0 %1305
        %v1308 = vunpack.c.l.b16 %v1249
        %v1309 = vpack.c.b16 %v1308, %v1308
        %1310 = vrot.lane.b32.xlu0 %v1309, 80
        %v1311 = vpop.permute.xlu0 %1310
        %v1313 = vunpack.c.l.b16 %v1217
        %v1314 = vpack.c.b16 %v1313, %v1313
        %1315 = vrot.lane.b32.xlu0 %v1314, 96
        %v1316 = vpop.permute.xlu0 %1315
        %v1318 = vunpack.c.l.b16 %v1251
        %v1319 = vpack.c.b16 %v1318, %v1318
        %1320 = vrot.lane.b32.xlu0 %v1319, 112
        %v1321 = vpop.permute.xlu0 %1320
        %v1324 = vsel %vm412, %v1140, %v1256
        %v1326 = vsel %vm416, %v1324, %v1261
        %v1328 = vsel %vm419, %v1326, %v1266
        %v1330 = vsel %vm422, %v1328, %v1271
        %v1332 = vsel %vm425, %v1330, %v1276
        %v1334 = vsel %vm428, %v1332, %v1281
        %v1336 = vsel %vm431, %v1334, %v1286
        %v1339 = vsel %vm412, %v1208, %v1291
        %v1341 = vsel %vm416, %v1339, %v1296
        %v1343 = vsel %vm419, %v1341, %v1301
        %v1345 = vsel %vm422, %v1343, %v1306
        %v1347 = vsel %vm425, %v1345, %v1311
        %v1349 = vsel %vm428, %v1347, %v1316
        %v1351 = vsel %vm431, %v1349, %v1321
        %1352 = vrot.lane.b32.xlu0 %v1022, 127
        %v1353 = vpop.permute.xlu0 %1352
        %1354 = vrot.lane.b32.xlu0 %v1031, 127
        %v1355 = vpop.permute.xlu0 %1354
        %1356 = vrot.lane.b32.xlu0 %v1042, 127
        %v1357 = vpop.permute.xlu0 %1356
        %1358 = vrot.lane.b32.xlu0 %v1051, 127
        %v1359 = vpop.permute.xlu0 %1358
        %1360 = vrot.lane.b32.xlu0 %v1062, 127
        %v1361 = vpop.permute.xlu0 %1360
        %1362 = vrot.lane.b32.xlu0 %v1071, 127
        %v1363 = vpop.permute.xlu0 %1362
        %1364 = vrot.lane.b32.xlu0 %v1082, 127
        %v1365 = vpop.permute.xlu0 %1364
        %1366 = vrot.lane.b32.xlu0 %v1091, 127
        %v1367 = vpop.permute.xlu0 %1366
        %v1370 = vpack.i.b16 %v1357, %v1353
        %v1371 = vshrl.u32 %v1353, 16
        %v1372 = vshrl.u32 %v1357, 16
        %v1373 = vpack.i.b16 %v1372, %v1371
        %v1376 = vpack.i.b16 %v1365, %v1361
        %v1377 = vshrl.u32 %v1361, 16
        %v1378 = vshrl.u32 %v1365, 16
        %v1379 = vpack.i.b16 %v1378, %v1377
        %v1382 = vpack.i.b16 %v1359, %v1355
        %v1383 = vshrl.u32 %v1355, 16
        %v1384 = vshrl.u32 %v1359, 16
        %v1385 = vpack.i.b16 %v1384, %v1383
        %v1388 = vpack.i.b16 %v1367, %v1363
        %v1389 = vshrl.u32 %v1363, 16
        %v1390 = vshrl.u32 %v1367, 16
        %v1391 = vpack.i.b16 %v1390, %v1389
        %v1394 = vunpack.c.l.s4 1983009808
        %v1395 = vunpack.c.0.s8 %v1394
        %v1396 = vlaneseq
        %v1397 = vshrl.u32 %v1396, 7
        %v1398 = vsub.s32 %v1395, %v1397
        %v1399 = vrot.slane %v1370, %v1398
        %v1402 = vunpack.c.l.s4 1983009808
        %v1403 = vunpack.c.0.s8 %v1402
        %v1404 = vlaneseq
        %v1405 = vshrl.u32 %v1404, 7
        %v1406 = vsub.s32 %v1403, %v1405
        %v1407 = vrot.slane %v1376, %v1406
        %v1408 = vcombine.low %v1399, %v1407
        %v1409 = vcombine.high %v1399, %v1407
        %v1411 = vunpack.c.l.s4 1934713408
        %v1412 = vunpack.c.0.s8 %v1411
        %v1413 = vlaneseq
        %v1414 = vshrl.u32 %v1413, 7
        %v1415 = vsub.s32 %v1412, %v1414
        %v1416 = vrot.slane %v1408, %v1415
        %v1418 = vunpack.c.l.s4 1934713408
        %v1419 = vunpack.c.0.s8 %v1418
        %v1420 = vlaneseq
        %v1421 = vshrl.u32 %v1420, 7
        %v1422 = vsub.s32 %v1419, %v1421
        %v1423 = vrot.slane %v1409, %v1422
        %v1424 = vcombine.high %v1416, 0
        %v1425 = vcombine.high %v1423, 0
        %v1428 = vunpack.c.l.s4 1983009808
        %v1429 = vunpack.c.0.s8 %v1428
        %v1430 = vlaneseq
        %v1431 = vshrl.u32 %v1430, 7
        %v1432 = vsub.s32 %v1429, %v1431
        %v1433 = vrot.slane %v1373, %v1432
        %v1436 = vunpack.c.l.s4 1983009808
        %v1437 = vunpack.c.0.s8 %v1436
        %v1438 = vlaneseq
        %v1439 = vshrl.u32 %v1438, 7
        %v1440 = vsub.s32 %v1437, %v1439
        %v1441 = vrot.slane %v1379, %v1440
        %v1442 = vcombine.low %v1433, %v1441
        %v1443 = vcombine.high %v1433, %v1441
        %v1445 = vunpack.c.l.s4 1934713408
        %v1446 = vunpack.c.0.s8 %v1445
        %v1447 = vlaneseq
        %v1448 = vshrl.u32 %v1447, 7
        %v1449 = vsub.s32 %v1446, %v1448
        %v1450 = vrot.slane %v1442, %v1449
        %v1452 = vunpack.c.l.s4 1934713408
        %v1453 = vunpack.c.0.s8 %v1452
        %v1454 = vlaneseq
        %v1455 = vshrl.u32 %v1454, 7
        %v1456 = vsub.s32 %v1453, %v1455
        %v1457 = vrot.slane %v1443, %v1456
        %v1458 = vcombine.high %v1450, 0
        %v1459 = vcombine.high %v1457, 0
        %v1462 = vunpack.c.l.s4 1983009808
        %v1463 = vunpack.c.0.s8 %v1462
        %v1464 = vlaneseq
        %v1465 = vshrl.u32 %v1464, 7
        %v1466 = vsub.s32 %v1463, %v1465
        %v1467 = vrot.slane %v1382, %v1466
        %v1470 = vunpack.c.l.s4 1983009808
        %v1471 = vunpack.c.0.s8 %v1470
        %v1472 = vlaneseq
        %v1473 = vshrl.u32 %v1472, 7
        %v1474 = vsub.s32 %v1471, %v1473
        %v1475 = vrot.slane %v1388, %v1474
        %v1476 = vcombine.low %v1467, %v1475
        %v1477 = vcombine.high %v1467, %v1475
        %v1479 = vunpack.c.l.s4 1934713408
        %v1480 = vunpack.c.0.s8 %v1479
        %v1481 = vlaneseq
        %v1482 = vshrl.u32 %v1481, 7
        %v1483 = vsub.s32 %v1480, %v1482
        %v1484 = vrot.slane %v1476, %v1483
        %v1486 = vunpack.c.l.s4 1934713408
        %v1487 = vunpack.c.0.s8 %v1486
        %v1488 = vlaneseq
        %v1489 = vshrl.u32 %v1488, 7
        %v1490 = vsub.s32 %v1487, %v1489
        %v1491 = vrot.slane %v1477, %v1490
        %v1492 = vcombine.high %v1484, 0
        %v1493 = vcombine.high %v1491, 0
        %v1496 = vunpack.c.l.s4 1983009808
        %v1497 = vunpack.c.0.s8 %v1496
        %v1498 = vlaneseq
        %v1499 = vshrl.u32 %v1498, 7
        %v1500 = vsub.s32 %v1497, %v1499
        %v1501 = vrot.slane %v1385, %v1500
        %v1504 = vunpack.c.l.s4 1983009808
        %v1505 = vunpack.c.0.s8 %v1504
        %v1506 = vlaneseq
        %v1507 = vshrl.u32 %v1506, 7
        %v1508 = vsub.s32 %v1505, %v1507
        %v1509 = vrot.slane %v1391, %v1508
        %v1510 = vcombine.low %v1501, %v1509
        %v1511 = vcombine.high %v1501, %v1509
        %v1513 = vunpack.c.l.s4 1934713408
        %v1514 = vunpack.c.0.s8 %v1513
        %v1515 = vlaneseq
        %v1516 = vshrl.u32 %v1515, 7
        %v1517 = vsub.s32 %v1514, %v1516
        %v1518 = vrot.slane %v1510, %v1517
        %v1520 = vunpack.c.l.s4 1934713408
        %v1521 = vunpack.c.0.s8 %v1520
        %v1522 = vlaneseq
        %v1523 = vshrl.u32 %v1522, 7
        %v1524 = vsub.s32 %v1521, %v1523
        %v1525 = vrot.slane %v1511, %v1524
        %v1526 = vcombine.high %v1518, 0
        %v1527 = vcombine.high %v1525, 0
        %v1529 = vunpack.c.l.b16 %v1450
        %v1530 = vpack.c.b16 %v1529, %v1529
        %1531 = vrot.lane.b32.xlu0 %v1530, 16
        %v1532 = vpop.permute.xlu0 %1531
        %v1534 = vunpack.c.l.b16 %v1424
        %v1535 = vpack.c.b16 %v1534, %v1534
        %1536 = vrot.lane.b32.xlu0 %v1535, 32
        %v1537 = vpop.permute.xlu0 %1536
        %v1539 = vunpack.c.l.b16 %v1458
        %v1540 = vpack.c.b16 %v1539, %v1539
        %1541 = vrot.lane.b32.xlu0 %v1540, 48
        %v1542 = vpop.permute.xlu0 %1541
        %v1544 = vunpack.c.l.b16 %v1423
        %v1545 = vpack.c.b16 %v1544, %v1544
        %1546 = vrot.lane.b32.xlu0 %v1545, 64
        %v1547 = vpop.permute.xlu0 %1546
        %v1549 = vunpack.c.l.b16 %v1457
        %v1550 = vpack.c.b16 %v1549, %v1549
        %1551 = vrot.lane.b32.xlu0 %v1550, 80
        %v1552 = vpop.permute.xlu0 %1551
        %v1554 = vunpack.c.l.b16 %v1425
        %v1555 = vpack.c.b16 %v1554, %v1554
        %1556 = vrot.lane.b32.xlu0 %v1555, 96
        %v1557 = vpop.permute.xlu0 %1556
        %v1559 = vunpack.c.l.b16 %v1459
        %v1560 = vpack.c.b16 %v1559, %v1559
        %1561 = vrot.lane.b32.xlu0 %v1560, 112
        %v1562 = vpop.permute.xlu0 %1561
        %v1564 = vunpack.c.l.b16 %v1518
        %v1565 = vpack.c.b16 %v1564, %v1564
        %1566 = vrot.lane.b32.xlu0 %v1565, 16
        %v1567 = vpop.permute.xlu0 %1566
        %v1569 = vunpack.c.l.b16 %v1492
        %v1570 = vpack.c.b16 %v1569, %v1569
        %1571 = vrot.lane.b32.xlu0 %v1570, 32
        %v1572 = vpop.permute.xlu0 %1571
        %v1574 = vunpack.c.l.b16 %v1526
        %v1575 = vpack.c.b16 %v1574, %v1574
        %1576 = vrot.lane.b32.xlu0 %v1575, 48
        %v1577 = vpop.permute.xlu0 %1576
        %v1579 = vunpack.c.l.b16 %v1491
        %v1580 = vpack.c.b16 %v1579, %v1579
        %1581 = vrot.lane.b32.xlu0 %v1580, 64
        %v1582 = vpop.permute.xlu0 %1581
        %v1584 = vunpack.c.l.b16 %v1525
        %v1585 = vpack.c.b16 %v1584, %v1584
        %1586 = vrot.lane.b32.xlu0 %v1585, 80
        %v1587 = vpop.permute.xlu0 %1586
        %v1589 = vunpack.c.l.b16 %v1493
        %v1590 = vpack.c.b16 %v1589, %v1589
        %1591 = vrot.lane.b32.xlu0 %v1590, 96
        %v1592 = vpop.permute.xlu0 %1591
        %v1594 = vunpack.c.l.b16 %v1527
        %v1595 = vpack.c.b16 %v1594, %v1594
        %1596 = vrot.lane.b32.xlu0 %v1595, 112
        %v1597 = vpop.permute.xlu0 %1596
        %v1600 = vsel %vm412, %v1416, %v1532
        %v1602 = vsel %vm416, %v1600, %v1537
        %v1604 = vsel %vm419, %v1602, %v1542
        %v1606 = vsel %vm422, %v1604, %v1547
        %v1608 = vsel %vm425, %v1606, %v1552
        %v1610 = vsel %vm428, %v1608, %v1557
        %v1612 = vsel %vm431, %v1610, %v1562
        %v1615 = vsel %vm412, %v1484, %v1567
        %v1617 = vsel %vm416, %v1615, %v1572
        %v1619 = vsel %vm419, %v1617, %v1577
        %v1621 = vsel %vm422, %v1619, %v1582
        %v1623 = vsel %vm425, %v1621, %v1587
        %v1625 = vsel %vm428, %v1623, %v1592
        %v1627 = vsel %vm431, %v1625, %v1597
        %1628 = vrot.lane.b32.xlu0 %v1022, 126
        %v1629 = vpop.permute.xlu0 %1628
        %1630 = vrot.lane.b32.xlu0 %v1031, 126
        %v1631 = vpop.permute.xlu0 %1630
        %1632 = vrot.lane.b32.xlu0 %v1042, 126
        %v1633 = vpop.permute.xlu0 %1632
        %1634 = vrot.lane.b32.xlu0 %v1051, 126
        %v1635 = vpop.permute.xlu0 %1634
        %1636 = vrot.lane.b32.xlu0 %v1062, 126
        %v1637 = vpop.permute.xlu0 %1636
        %1638 = vrot.lane.b32.xlu0 %v1071, 126
        %v1639 = vpop.permute.xlu0 %1638
        %1640 = vrot.lane.b32.xlu0 %v1082, 126
        %v1641 = vpop.permute.xlu0 %1640
        %1642 = vrot.lane.b32.xlu0 %v1091, 126
        %v1643 = vpop.permute.xlu0 %1642
        %v1646 = vpack.i.b16 %v1633, %v1629
        %v1647 = vshrl.u32 %v1629, 16
        %v1648 = vshrl.u32 %v1633, 16
        %v1649 = vpack.i.b16 %v1648, %v1647
        %v1652 = vpack.i.b16 %v1641, %v1637
        %v1653 = vshrl.u32 %v1637, 16
        %v1654 = vshrl.u32 %v1641, 16
        %v1655 = vpack.i.b16 %v1654, %v1653
        %v1658 = vpack.i.b16 %v1635, %v1631
        %v1659 = vshrl.u32 %v1631, 16
        %v1660 = vshrl.u32 %v1635, 16
        %v1661 = vpack.i.b16 %v1660, %v1659
        %v1664 = vpack.i.b16 %v1643, %v1639
        %v1665 = vshrl.u32 %v1639, 16
        %v1666 = vshrl.u32 %v1643, 16
        %v1667 = vpack.i.b16 %v1666, %v1665
        %v1670 = vunpack.c.l.s4 1983009808
        %v1671 = vunpack.c.0.s8 %v1670
        %v1672 = vlaneseq
        %v1673 = vshrl.u32 %v1672, 7
        %v1674 = vsub.s32 %v1671, %v1673
        %v1675 = vrot.slane %v1646, %v1674
        %v1678 = vunpack.c.l.s4 1983009808
        %v1679 = vunpack.c.0.s8 %v1678
        %v1680 = vlaneseq
        %v1681 = vshrl.u32 %v1680, 7
        %v1682 = vsub.s32 %v1679, %v1681
        %v1683 = vrot.slane %v1652, %v1682
        %v1684 = vcombine.low %v1675, %v1683
        %v1685 = vcombine.high %v1675, %v1683
        %v1687 = vunpack.c.l.s4 1934713408
        %v1688 = vunpack.c.0.s8 %v1687
        %v1689 = vlaneseq
        %v1690 = vshrl.u32 %v1689, 7
        %v1691 = vsub.s32 %v1688, %v1690
        %v1692 = vrot.slane %v1684, %v1691
        %v1694 = vunpack.c.l.s4 1934713408
        %v1695 = vunpack.c.0.s8 %v1694
        %v1696 = vlaneseq
        %v1697 = vshrl.u32 %v1696, 7
        %v1698 = vsub.s32 %v1695, %v1697
        %v1699 = vrot.slane %v1685, %v1698
        %v1700 = vcombine.high %v1692, 0
        %v1701 = vcombine.high %v1699, 0
        %v1704 = vunpack.c.l.s4 1983009808
        %v1705 = vunpack.c.0.s8 %v1704
        %v1706 = vlaneseq
        %v1707 = vshrl.u32 %v1706, 7
        %v1708 = vsub.s32 %v1705, %v1707
        %v1709 = vrot.slane %v1649, %v1708
        %v1712 = vunpack.c.l.s4 1983009808
        %v1713 = vunpack.c.0.s8 %v1712
        %v1714 = vlaneseq
        %v1715 = vshrl.u32 %v1714, 7
        %v1716 = vsub.s32 %v1713, %v1715
        %v1717 = vrot.slane %v1655, %v1716
        %v1718 = vcombine.low %v1709, %v1717
        %v1719 = vcombine.high %v1709, %v1717
        %v1721 = vunpack.c.l.s4 1934713408
        %v1722 = vunpack.c.0.s8 %v1721
        %v1723 = vlaneseq
        %v1724 = vshrl.u32 %v1723, 7
        %v1725 = vsub.s32 %v1722, %v1724
        %v1726 = vrot.slane %v1718, %v1725
        %v1728 = vunpack.c.l.s4 1934713408
        %v1729 = vunpack.c.0.s8 %v1728
        %v1730 = vlaneseq
        %v1731 = vshrl.u32 %v1730, 7
        %v1732 = vsub.s32 %v1729, %v1731
        %v1733 = vrot.slane %v1719, %v1732
        %v1734 = vcombine.high %v1726, 0
        %v1735 = vcombine.high %v1733, 0
        %v1738 = vunpack.c.l.s4 1983009808
        %v1739 = vunpack.c.0.s8 %v1738
        %v1740 = vlaneseq
        %v1741 = vshrl.u32 %v1740, 7
        %v1742 = vsub.s32 %v1739, %v1741
        %v1743 = vrot.slane %v1658, %v1742
        %v1746 = vunpack.c.l.s4 1983009808
        %v1747 = vunpack.c.0.s8 %v1746
        %v1748 = vlaneseq
        %v1749 = vshrl.u32 %v1748, 7
        %v1750 = vsub.s32 %v1747, %v1749
        %v1751 = vrot.slane %v1664, %v1750
        %v1752 = vcombine.low %v1743, %v1751
        %v1753 = vcombine.high %v1743, %v1751
        %v1755 = vunpack.c.l.s4 1934713408
        %v1756 = vunpack.c.0.s8 %v1755
        %v1757 = vlaneseq
        %v1758 = vshrl.u32 %v1757, 7
        %v1759 = vsub.s32 %v1756, %v1758
        %v1760 = vrot.slane %v1752, %v1759
        %v1762 = vunpack.c.l.s4 1934713408
        %v1763 = vunpack.c.0.s8 %v1762
        %v1764 = vlaneseq
        %v1765 = vshrl.u32 %v1764, 7
        %v1766 = vsub.s32 %v1763, %v1765
        %v1767 = vrot.slane %v1753, %v1766
        %v1768 = vcombine.high %v1760, 0
        %v1769 = vcombine.high %v1767, 0
        %v1772 = vunpack.c.l.s4 1983009808
        %v1773 = vunpack.c.0.s8 %v1772
        %v1774 = vlaneseq
        %v1775 = vshrl.u32 %v1774, 7
        %v1776 = vsub.s32 %v1773, %v1775
        %v1777 = vrot.slane %v1661, %v1776
        %v1780 = vunpack.c.l.s4 1983009808
        %v1781 = vunpack.c.0.s8 %v1780
        %v1782 = vlaneseq
        %v1783 = vshrl.u32 %v1782, 7
        %v1784 = vsub.s32 %v1781, %v1783
        %v1785 = vrot.slane %v1667, %v1784
        %v1786 = vcombine.low %v1777, %v1785
        %v1787 = vcombine.high %v1777, %v1785
        %v1789 = vunpack.c.l.s4 1934713408
        %v1790 = vunpack.c.0.s8 %v1789
        %v1791 = vlaneseq
        %v1792 = vshrl.u32 %v1791, 7
        %v1793 = vsub.s32 %v1790, %v1792
        %v1794 = vrot.slane %v1786, %v1793
        %v1796 = vunpack.c.l.s4 1934713408
        %v1797 = vunpack.c.0.s8 %v1796
        %v1798 = vlaneseq
        %v1799 = vshrl.u32 %v1798, 7
        %v1800 = vsub.s32 %v1797, %v1799
        %v1801 = vrot.slane %v1787, %v1800
        %v1802 = vcombine.high %v1794, 0
        %v1803 = vcombine.high %v1801, 0
        %v1805 = vunpack.c.l.b16 %v1726
        %v1806 = vpack.c.b16 %v1805, %v1805
        %1807 = vrot.lane.b32.xlu0 %v1806, 16
        %v1808 = vpop.permute.xlu0 %1807
        %v1810 = vunpack.c.l.b16 %v1700
        %v1811 = vpack.c.b16 %v1810, %v1810
        %1812 = vrot.lane.b32.xlu0 %v1811, 32
        %v1813 = vpop.permute.xlu0 %1812
        %v1815 = vunpack.c.l.b16 %v1734
        %v1816 = vpack.c.b16 %v1815, %v1815
        %1817 = vrot.lane.b32.xlu0 %v1816, 48
        %v1818 = vpop.permute.xlu0 %1817
        %v1820 = vunpack.c.l.b16 %v1699
        %v1821 = vpack.c.b16 %v1820, %v1820
        %1822 = vrot.lane.b32.xlu0 %v1821, 64
        %v1823 = vpop.permute.xlu0 %1822
        %v1825 = vunpack.c.l.b16 %v1733
        %v1826 = vpack.c.b16 %v1825, %v1825
        %1827 = vrot.lane.b32.xlu0 %v1826, 80
        %v1828 = vpop.permute.xlu0 %1827
        %v1830 = vunpack.c.l.b16 %v1701
        %v1831 = vpack.c.b16 %v1830, %v1830
        %1832 = vrot.lane.b32.xlu0 %v1831, 96
        %v1833 = vpop.permute.xlu0 %1832
        %v1835 = vunpack.c.l.b16 %v1735
        %v1836 = vpack.c.b16 %v1835, %v1835
        %1837 = vrot.lane.b32.xlu0 %v1836, 112
        %v1838 = vpop.permute.xlu0 %1837
        %v1840 = vunpack.c.l.b16 %v1794
        %v1841 = vpack.c.b16 %v1840, %v1840
        %1842 = vrot.lane.b32.xlu0 %v1841, 16
        %v1843 = vpop.permute.xlu0 %1842
        %v1845 = vunpack.c.l.b16 %v1768
        %v1846 = vpack.c.b16 %v1845, %v1845
        %1847 = vrot.lane.b32.xlu0 %v1846, 32
        %v1848 = vpop.permute.xlu0 %1847
        %v1850 = vunpack.c.l.b16 %v1802
        %v1851 = vpack.c.b16 %v1850, %v1850
        %1852 = vrot.lane.b32.xlu0 %v1851, 48
        %v1853 = vpop.permute.xlu0 %1852
        %v1855 = vunpack.c.l.b16 %v1767
        %v1856 = vpack.c.b16 %v1855, %v1855
        %1857 = vrot.lane.b32.xlu0 %v1856, 64
        %v1858 = vpop.permute.xlu0 %1857
        %v1860 = vunpack.c.l.b16 %v1801
        %v1861 = vpack.c.b16 %v1860, %v1860
        %1862 = vrot.lane.b32.xlu0 %v1861, 80
        %v1863 = vpop.permute.xlu0 %1862
        %v1865 = vunpack.c.l.b16 %v1769
        %v1866 = vpack.c.b16 %v1865, %v1865
        %1867 = vrot.lane.b32.xlu0 %v1866, 96
        %v1868 = vpop.permute.xlu0 %1867
        %v1870 = vunpack.c.l.b16 %v1803
        %v1871 = vpack.c.b16 %v1870, %v1870
        %1872 = vrot.lane.b32.xlu0 %v1871, 112
        %v1873 = vpop.permute.xlu0 %1872
        %v1876 = vsel %vm412, %v1692, %v1808
        %v1878 = vsel %vm416, %v1876, %v1813
        %v1880 = vsel %vm419, %v1878, %v1818
        %v1882 = vsel %vm422, %v1880, %v1823
        %v1884 = vsel %vm425, %v1882, %v1828
        %v1886 = vsel %vm428, %v1884, %v1833
        %v1888 = vsel %vm431, %v1886, %v1838
        %v1891 = vsel %vm412, %v1760, %v1843
        %v1893 = vsel %vm416, %v1891, %v1848
        %v1895 = vsel %vm419, %v1893, %v1853
        %v1897 = vsel %vm422, %v1895, %v1858
        %v1899 = vsel %vm425, %v1897, %v1863
        %v1901 = vsel %vm428, %v1899, %v1868
        %v1903 = vsel %vm431, %v1901, %v1873
        %vm1908 = vcmask 1042432
        %vm1909 = vcmask 1046532
        %vm1910 = vmor %vm1908, %vm1909
        %v1911 = vrot.slane %v170, 5
        %v1912 = vrot.slane %v1911, 4
        %v1913 = vrot.slane %v171, 5
        %v1914 = vsel %vm1910, %v1912, %v1913
        %v1915 = vrot.slane %v1913, 4
        %v1916 = vrot.slane %v172, 5
        %v1917 = vsel %vm1910, %v1915, %v1916
        %v1918 = vrot.slane %v173, 5
        %v1919 = vrot.slane %v1918, 4
        %v1920 = vrot.slane %v174, 5
        %v1921 = vsel %vm1910, %v1919, %v1920
        %v1922 = vrot.slane %v1920, 4
        %v1923 = vrot.slane %v175, 5
        %v1924 = vsel %vm1910, %v1922, %v1923
        %v1925 = vrot.slane %v176, 5
        %v1926 = vrot.slane %v1925, 4
        %v1927 = vrot.slane %v177, 5
        %v1928 = vsel %vm1910, %v1926, %v1927
        %v1929 = vrot.slane %v1927, 4
        %v1930 = vrot.slane %v178, 5
        %v1931 = vsel %vm1910, %v1929, %v1930
        %v1932 = vrot.slane %v179, 5
        %v1933 = vrot.slane %v1932, 4
        %v1934 = vrot.slane %v180, 5
        %v1935 = vsel %vm1910, %v1933, %v1934
        %v1936 = vrot.slane %v1934, 4
        %v1937 = vrot.slane %v181, 5
        %v1938 = vsel %vm1910, %v1936, %v1937
        %v1941 = vpack.i.b16 %v1921, %v1914
        %v1942 = vshrl.u32 %v1914, 16
        %v1943 = vshrl.u32 %v1921, 16
        %v1944 = vpack.i.b16 %v1943, %v1942
        %v1947 = vpack.i.b16 %v1935, %v1928
        %v1948 = vshrl.u32 %v1928, 16
        %v1949 = vshrl.u32 %v1935, 16
        %v1950 = vpack.i.b16 %v1949, %v1948
        %v1953 = vpack.i.b16 %v1924, %v1917
        %v1954 = vshrl.u32 %v1917, 16
        %v1955 = vshrl.u32 %v1924, 16
        %v1956 = vpack.i.b16 %v1955, %v1954
        %v1959 = vpack.i.b16 %v1938, %v1931
        %v1960 = vshrl.u32 %v1931, 16
        %v1961 = vshrl.u32 %v1938, 16
        %v1962 = vpack.i.b16 %v1961, %v1960
        %v1965 = vunpack.c.l.s4 1983009808
        %v1966 = vunpack.c.0.s8 %v1965
        %v1967 = vlaneseq
        %v1968 = vshrl.u32 %v1967, 7
        %v1969 = vsub.s32 %v1966, %v1968
        %v1970 = vrot.slane %v1941, %v1969
        %v1973 = vunpack.c.l.s4 1983009808
        %v1974 = vunpack.c.0.s8 %v1973
        %v1975 = vlaneseq
        %v1976 = vshrl.u32 %v1975, 7
        %v1977 = vsub.s32 %v1974, %v1976
        %v1978 = vrot.slane %v1947, %v1977
        %v1979 = vcombine.low %v1970, %v1978
        %v1980 = vcombine.high %v1970, %v1978
        %v1982 = vunpack.c.l.s4 1934713408
        %v1983 = vunpack.c.0.s8 %v1982
        %v1984 = vlaneseq
        %v1985 = vshrl.u32 %v1984, 7
        %v1986 = vsub.s32 %v1983, %v1985
        %v1987 = vrot.slane %v1979, %v1986
        %v1989 = vunpack.c.l.s4 1934713408
        %v1990 = vunpack.c.0.s8 %v1989
        %v1991 = vlaneseq
        %v1992 = vshrl.u32 %v1991, 7
        %v1993 = vsub.s32 %v1990, %v1992
        %v1994 = vrot.slane %v1980, %v1993
        %v1995 = vcombine.high %v1987, 0
        %v1996 = vcombine.high %v1994, 0
        %v1999 = vunpack.c.l.s4 1983009808
        %v2000 = vunpack.c.0.s8 %v1999
        %v2001 = vlaneseq
        %v2002 = vshrl.u32 %v2001, 7
        %v2003 = vsub.s32 %v2000, %v2002
        %v2004 = vrot.slane %v1944, %v2003
        %v2007 = vunpack.c.l.s4 1983009808
        %v2008 = vunpack.c.0.s8 %v2007
        %v2009 = vlaneseq
        %v2010 = vshrl.u32 %v2009, 7
        %v2011 = vsub.s32 %v2008, %v2010
        %v2012 = vrot.slane %v1950, %v2011
        %v2013 = vcombine.low %v2004, %v2012
        %v2014 = vcombine.high %v2004, %v2012
        %v2016 = vunpack.c.l.s4 1934713408
        %v2017 = vunpack.c.0.s8 %v2016
        %v2018 = vlaneseq
        %v2019 = vshrl.u32 %v2018, 7
        %v2020 = vsub.s32 %v2017, %v2019
        %v2021 = vrot.slane %v2013, %v2020
        %v2023 = vunpack.c.l.s4 1934713408
        %v2024 = vunpack.c.0.s8 %v2023
        %v2025 = vlaneseq
        %v2026 = vshrl.u32 %v2025, 7
        %v2027 = vsub.s32 %v2024, %v2026
        %v2028 = vrot.slane %v2014, %v2027
        %v2029 = vcombine.high %v2021, 0
        %v2030 = vcombine.high %v2028, 0
        %v2033 = vunpack.c.l.s4 1983009808
        %v2034 = vunpack.c.0.s8 %v2033
        %v2035 = vlaneseq
        %v2036 = vshrl.u32 %v2035, 7
        %v2037 = vsub.s32 %v2034, %v2036
        %v2038 = vrot.slane %v1953, %v2037
        %v2041 = vunpack.c.l.s4 1983009808
        %v2042 = vunpack.c.0.s8 %v2041
        %v2043 = vlaneseq
        %v2044 = vshrl.u32 %v2043, 7
        %v2045 = vsub.s32 %v2042, %v2044
        %v2046 = vrot.slane %v1959, %v2045
        %v2047 = vcombine.low %v2038, %v2046
        %v2048 = vcombine.high %v2038, %v2046
        %v2050 = vunpack.c.l.s4 1934713408
        %v2051 = vunpack.c.0.s8 %v2050
        %v2052 = vlaneseq
        %v2053 = vshrl.u32 %v2052, 7
        %v2054 = vsub.s32 %v2051, %v2053
        %v2055 = vrot.slane %v2047, %v2054
        %v2057 = vunpack.c.l.s4 1934713408
        %v2058 = vunpack.c.0.s8 %v2057
        %v2059 = vlaneseq
        %v2060 = vshrl.u32 %v2059, 7
        %v2061 = vsub.s32 %v2058, %v2060
        %v2062 = vrot.slane %v2048, %v2061
        %v2063 = vcombine.high %v2055, 0
        %v2064 = vcombine.high %v2062, 0
        %v2067 = vunpack.c.l.s4 1983009808
        %v2068 = vunpack.c.0.s8 %v2067
        %v2069 = vlaneseq
        %v2070 = vshrl.u32 %v2069, 7
        %v2071 = vsub.s32 %v2068, %v2070
        %v2072 = vrot.slane %v1956, %v2071
        %v2075 = vunpack.c.l.s4 1983009808
        %v2076 = vunpack.c.0.s8 %v2075
        %v2077 = vlaneseq
        %v2078 = vshrl.u32 %v2077, 7
        %v2079 = vsub.s32 %v2076, %v2078
        %v2080 = vrot.slane %v1962, %v2079
        %v2081 = vcombine.low %v2072, %v2080
        %v2082 = vcombine.high %v2072, %v2080
        %v2084 = vunpack.c.l.s4 1934713408
        %v2085 = vunpack.c.0.s8 %v2084
        %v2086 = vlaneseq
        %v2087 = vshrl.u32 %v2086, 7
        %v2088 = vsub.s32 %v2085, %v2087
        %v2089 = vrot.slane %v2081, %v2088
        %v2091 = vunpack.c.l.s4 1934713408
        %v2092 = vunpack.c.0.s8 %v2091
        %v2093 = vlaneseq
        %v2094 = vshrl.u32 %v2093, 7
        %v2095 = vsub.s32 %v2092, %v2094
        %v2096 = vrot.slane %v2082, %v2095
        %v2097 = vcombine.high %v2089, 0
        %v2098 = vcombine.high %v2096, 0
        %v2100 = vunpack.c.l.b16 %v2021
        %v2101 = vpack.c.b16 %v2100, %v2100
        %2102 = vrot.lane.b32.xlu0 %v2101, 16
        %v2103 = vpop.permute.xlu0 %2102
        %v2105 = vunpack.c.l.b16 %v1995
        %v2106 = vpack.c.b16 %v2105, %v2105
        %2107 = vrot.lane.b32.xlu0 %v2106, 32
        %v2108 = vpop.permute.xlu0 %2107
        %v2110 = vunpack.c.l.b16 %v2029
        %v2111 = vpack.c.b16 %v2110, %v2110
        %2112 = vrot.lane.b32.xlu0 %v2111, 48
        %v2113 = vpop.permute.xlu0 %2112
        %v2115 = vunpack.c.l.b16 %v1994
        %v2116 = vpack.c.b16 %v2115, %v2115
        %2117 = vrot.lane.b32.xlu0 %v2116, 64
        %v2118 = vpop.permute.xlu0 %2117
        %v2120 = vunpack.c.l.b16 %v2028
        %v2121 = vpack.c.b16 %v2120, %v2120
        %2122 = vrot.lane.b32.xlu0 %v2121, 80
        %v2123 = vpop.permute.xlu0 %2122
        %v2125 = vunpack.c.l.b16 %v1996
        %v2126 = vpack.c.b16 %v2125, %v2125
        %2127 = vrot.lane.b32.xlu0 %v2126, 96
        %v2128 = vpop.permute.xlu0 %2127
        %v2130 = vunpack.c.l.b16 %v2030
        %v2131 = vpack.c.b16 %v2130, %v2130
        %2132 = vrot.lane.b32.xlu0 %v2131, 112
        %v2133 = vpop.permute.xlu0 %2132
        %v2135 = vunpack.c.l.b16 %v2089
        %v2136 = vpack.c.b16 %v2135, %v2135
        %2137 = vrot.lane.b32.xlu0 %v2136, 16
        %v2138 = vpop.permute.xlu0 %2137
        %v2140 = vunpack.c.l.b16 %v2063
        %v2141 = vpack.c.b16 %v2140, %v2140
        %2142 = vrot.lane.b32.xlu0 %v2141, 32
        %v2143 = vpop.permute.xlu0 %2142
        %v2145 = vunpack.c.l.b16 %v2097
        %v2146 = vpack.c.b16 %v2145, %v2145
        %2147 = vrot.lane.b32.xlu0 %v2146, 48
        %v2148 = vpop.permute.xlu0 %2147
        %v2150 = vunpack.c.l.b16 %v2062
        %v2151 = vpack.c.b16 %v2150, %v2150
        %2152 = vrot.lane.b32.xlu0 %v2151, 64
        %v2153 = vpop.permute.xlu0 %2152
        %v2155 = vunpack.c.l.b16 %v2096
        %v2156 = vpack.c.b16 %v2155, %v2155
        %2157 = vrot.lane.b32.xlu0 %v2156, 80
        %v2158 = vpop.permute.xlu0 %2157
        %v2160 = vunpack.c.l.b16 %v2064
        %v2161 = vpack.c.b16 %v2160, %v2160
        %2162 = vrot.lane.b32.xlu0 %v2161, 96
        %v2163 = vpop.permute.xlu0 %2162
        %v2165 = vunpack.c.l.b16 %v2098
        %v2166 = vpack.c.b16 %v2165, %v2165
        %2167 = vrot.lane.b32.xlu0 %v2166, 112
        %v2168 = vpop.permute.xlu0 %2167
        %v2171 = vsel %vm412, %v1987, %v2103
        %v2173 = vsel %vm416, %v2171, %v2108
        %v2175 = vsel %vm419, %v2173, %v2113
        %v2177 = vsel %vm422, %v2175, %v2118
        %v2179 = vsel %vm425, %v2177, %v2123
        %v2181 = vsel %vm428, %v2179, %v2128
        %v2183 = vsel %vm431, %v2181, %v2133
        %v2186 = vsel %vm412, %v2055, %v2138
        %v2188 = vsel %vm416, %v2186, %v2143
        %v2190 = vsel %vm419, %v2188, %v2148
        %v2192 = vsel %vm422, %v2190, %v2153
        %v2194 = vsel %vm425, %v2192, %v2158
        %v2196 = vsel %vm428, %v2194, %v2163
        %v2198 = vsel %vm431, %v2196, %v2168
        %2199 = vrot.lane.b32.xlu0 %v1914, 127
        %v2200 = vpop.permute.xlu0 %2199
        %2201 = vrot.lane.b32.xlu0 %v1917, 127
        %v2202 = vpop.permute.xlu0 %2201
        %2203 = vrot.lane.b32.xlu0 %v1921, 127
        %v2204 = vpop.permute.xlu0 %2203
        %2205 = vrot.lane.b32.xlu0 %v1924, 127
        %v2206 = vpop.permute.xlu0 %2205
        %2207 = vrot.lane.b32.xlu0 %v1928, 127
        %v2208 = vpop.permute.xlu0 %2207
        %2209 = vrot.lane.b32.xlu0 %v1931, 127
        %v2210 = vpop.permute.xlu0 %2209
        %2211 = vrot.lane.b32.xlu0 %v1935, 127
        %v2212 = vpop.permute.xlu0 %2211
        %2213 = vrot.lane.b32.xlu0 %v1938, 127
        %v2214 = vpop.permute.xlu0 %2213
        %v2217 = vpack.i.b16 %v2204, %v2200
        %v2218 = vshrl.u32 %v2200, 16
        %v2219 = vshrl.u32 %v2204, 16
        %v2220 = vpack.i.b16 %v2219, %v2218
        %v2223 = vpack.i.b16 %v2212, %v2208
        %v2224 = vshrl.u32 %v2208, 16
        %v2225 = vshrl.u32 %v2212, 16
        %v2226 = vpack.i.b16 %v2225, %v2224
        %v2229 = vpack.i.b16 %v2206, %v2202
        %v2230 = vshrl.u32 %v2202, 16
        %v2231 = vshrl.u32 %v2206, 16
        %v2232 = vpack.i.b16 %v2231, %v2230
        %v2235 = vpack.i.b16 %v2214, %v2210
        %v2236 = vshrl.u32 %v2210, 16
        %v2237 = vshrl.u32 %v2214, 16
        %v2238 = vpack.i.b16 %v2237, %v2236
        %v2241 = vunpack.c.l.s4 1983009808
        %v2242 = vunpack.c.0.s8 %v2241
        %v2243 = vlaneseq
        %v2244 = vshrl.u32 %v2243, 7
        %v2245 = vsub.s32 %v2242, %v2244
        %v2246 = vrot.slane %v2217, %v2245
        %v2249 = vunpack.c.l.s4 1983009808
        %v2250 = vunpack.c.0.s8 %v2249
        %v2251 = vlaneseq
        %v2252 = vshrl.u32 %v2251, 7
        %v2253 = vsub.s32 %v2250, %v2252
        %v2254 = vrot.slane %v2223, %v2253
        %v2255 = vcombine.low %v2246, %v2254
        %v2256 = vcombine.high %v2246, %v2254
        %v2258 = vunpack.c.l.s4 1934713408
        %v2259 = vunpack.c.0.s8 %v2258
        %v2260 = vlaneseq
        %v2261 = vshrl.u32 %v2260, 7
        %v2262 = vsub.s32 %v2259, %v2261
        %v2263 = vrot.slane %v2255, %v2262
        %v2265 = vunpack.c.l.s4 1934713408
        %v2266 = vunpack.c.0.s8 %v2265
        %v2267 = vlaneseq
        %v2268 = vshrl.u32 %v2267, 7
        %v2269 = vsub.s32 %v2266, %v2268
        %v2270 = vrot.slane %v2256, %v2269
        %v2271 = vcombine.high %v2263, 0
        %v2272 = vcombine.high %v2270, 0
        %v2275 = vunpack.c.l.s4 1983009808
        %v2276 = vunpack.c.0.s8 %v2275
        %v2277 = vlaneseq
        %v2278 = vshrl.u32 %v2277, 7
        %v2279 = vsub.s32 %v2276, %v2278
        %v2280 = vrot.slane %v2220, %v2279
        %v2283 = vunpack.c.l.s4 1983009808
        %v2284 = vunpack.c.0.s8 %v2283
        %v2285 = vlaneseq
        %v2286 = vshrl.u32 %v2285, 7
        %v2287 = vsub.s32 %v2284, %v2286
        %v2288 = vrot.slane %v2226, %v2287
        %v2289 = vcombine.low %v2280, %v2288
        %v2290 = vcombine.high %v2280, %v2288
        %v2292 = vunpack.c.l.s4 1934713408
        %v2293 = vunpack.c.0.s8 %v2292
        %v2294 = vlaneseq
        %v2295 = vshrl.u32 %v2294, 7
        %v2296 = vsub.s32 %v2293, %v2295
        %v2297 = vrot.slane %v2289, %v2296
        %v2299 = vunpack.c.l.s4 1934713408
        %v2300 = vunpack.c.0.s8 %v2299
        %v2301 = vlaneseq
        %v2302 = vshrl.u32 %v2301, 7
        %v2303 = vsub.s32 %v2300, %v2302
        %v2304 = vrot.slane %v2290, %v2303
        %v2305 = vcombine.high %v2297, 0
        %v2306 = vcombine.high %v2304, 0
        %v2309 = vunpack.c.l.s4 1983009808
        %v2310 = vunpack.c.0.s8 %v2309
        %v2311 = vlaneseq
        %v2312 = vshrl.u32 %v2311, 7
        %v2313 = vsub.s32 %v2310, %v2312
        %v2314 = vrot.slane %v2229, %v2313
        %v2317 = vunpack.c.l.s4 1983009808
        %v2318 = vunpack.c.0.s8 %v2317
        %v2319 = vlaneseq
        %v2320 = vshrl.u32 %v2319, 7
        %v2321 = vsub.s32 %v2318, %v2320
        %v2322 = vrot.slane %v2235, %v2321
        %v2323 = vcombine.low %v2314, %v2322
        %v2324 = vcombine.high %v2314, %v2322
        %v2326 = vunpack.c.l.s4 1934713408
        %v2327 = vunpack.c.0.s8 %v2326
        %v2328 = vlaneseq
        %v2329 = vshrl.u32 %v2328, 7
        %v2330 = vsub.s32 %v2327, %v2329
        %v2331 = vrot.slane %v2323, %v2330
        %v2333 = vunpack.c.l.s4 1934713408
        %v2334 = vunpack.c.0.s8 %v2333
        %v2335 = vlaneseq
        %v2336 = vshrl.u32 %v2335, 7
        %v2337 = vsub.s32 %v2334, %v2336
        %v2338 = vrot.slane %v2324, %v2337
        %v2339 = vcombine.high %v2331, 0
        %v2340 = vcombine.high %v2338, 0
        %v2343 = vunpack.c.l.s4 1983009808
        %v2344 = vunpack.c.0.s8 %v2343
        %v2345 = vlaneseq
        %v2346 = vshrl.u32 %v2345, 7
        %v2347 = vsub.s32 %v2344, %v2346
        %v2348 = vrot.slane %v2232, %v2347
        %v2351 = vunpack.c.l.s4 1983009808
        %v2352 = vunpack.c.0.s8 %v2351
        %v2353 = vlaneseq
        %v2354 = vshrl.u32 %v2353, 7
        %v2355 = vsub.s32 %v2352, %v2354
        %v2356 = vrot.slane %v2238, %v2355
        %v2357 = vcombine.low %v2348, %v2356
        %v2358 = vcombine.high %v2348, %v2356
        %v2360 = vunpack.c.l.s4 1934713408
        %v2361 = vunpack.c.0.s8 %v2360
        %v2362 = vlaneseq
        %v2363 = vshrl.u32 %v2362, 7
        %v2364 = vsub.s32 %v2361, %v2363
        %v2365 = vrot.slane %v2357, %v2364
        %v2367 = vunpack.c.l.s4 1934713408
        %v2368 = vunpack.c.0.s8 %v2367
        %v2369 = vlaneseq
        %v2370 = vshrl.u32 %v2369, 7
        %v2371 = vsub.s32 %v2368, %v2370
        %v2372 = vrot.slane %v2358, %v2371
        %v2373 = vcombine.high %v2365, 0
        %v2374 = vcombine.high %v2372, 0
        %v2376 = vunpack.c.l.b16 %v2297
        %v2377 = vpack.c.b16 %v2376, %v2376
        %2378 = vrot.lane.b32.xlu0 %v2377, 16
        %v2379 = vpop.permute.xlu0 %2378
        %v2381 = vunpack.c.l.b16 %v2271
        %v2382 = vpack.c.b16 %v2381, %v2381
        %2383 = vrot.lane.b32.xlu0 %v2382, 32
        %v2384 = vpop.permute.xlu0 %2383
        %v2386 = vunpack.c.l.b16 %v2305
        %v2387 = vpack.c.b16 %v2386, %v2386
        %2388 = vrot.lane.b32.xlu0 %v2387, 48
        %v2389 = vpop.permute.xlu0 %2388
        %v2391 = vunpack.c.l.b16 %v2270
        %v2392 = vpack.c.b16 %v2391, %v2391
        %2393 = vrot.lane.b32.xlu0 %v2392, 64
        %v2394 = vpop.permute.xlu0 %2393
        %v2396 = vunpack.c.l.b16 %v2304
        %v2397 = vpack.c.b16 %v2396, %v2396
        %2398 = vrot.lane.b32.xlu0 %v2397, 80
        %v2399 = vpop.permute.xlu0 %2398
        %v2401 = vunpack.c.l.b16 %v2272
        %v2402 = vpack.c.b16 %v2401, %v2401
        %2403 = vrot.lane.b32.xlu0 %v2402, 96
        %v2404 = vpop.permute.xlu0 %2403
        %v2406 = vunpack.c.l.b16 %v2306
        %v2407 = vpack.c.b16 %v2406, %v2406
        %2408 = vrot.lane.b32.xlu0 %v2407, 112
        %v2409 = vpop.permute.xlu0 %2408
        %v2411 = vunpack.c.l.b16 %v2365
        %v2412 = vpack.c.b16 %v2411, %v2411
        %2413 = vrot.lane.b32.xlu0 %v2412, 16
        %v2414 = vpop.permute.xlu0 %2413
        %v2416 = vunpack.c.l.b16 %v2339
        %v2417 = vpack.c.b16 %v2416, %v2416
        %2418 = vrot.lane.b32.xlu0 %v2417, 32
        %v2419 = vpop.permute.xlu0 %2418
        %v2421 = vunpack.c.l.b16 %v2373
        %v2422 = vpack.c.b16 %v2421, %v2421
        %2423 = vrot.lane.b32.xlu0 %v2422, 48
        %v2424 = vpop.permute.xlu0 %2423
        %v2426 = vunpack.c.l.b16 %v2338
        %v2427 = vpack.c.b16 %v2426, %v2426
        %2428 = vrot.lane.b32.xlu0 %v2427, 64
        %v2429 = vpop.permute.xlu0 %2428
        %v2431 = vunpack.c.l.b16 %v2372
        %v2432 = vpack.c.b16 %v2431, %v2431
        %2433 = vrot.lane.b32.xlu0 %v2432, 80
        %v2434 = vpop.permute.xlu0 %2433
        %v2436 = vunpack.c.l.b16 %v2340
        %v2437 = vpack.c.b16 %v2436, %v2436
        %2438 = vrot.lane.b32.xlu0 %v2437, 96
        %v2439 = vpop.permute.xlu0 %2438
        %v2441 = vunpack.c.l.b16 %v2374
        %v2442 = vpack.c.b16 %v2441, %v2441
        %2443 = vrot.lane.b32.xlu0 %v2442, 112
        %v2444 = vpop.permute.xlu0 %2443
        %v2447 = vsel %vm412, %v2263, %v2379
        %v2449 = vsel %vm416, %v2447, %v2384
        %v2451 = vsel %vm419, %v2449, %v2389
        %v2453 = vsel %vm422, %v2451, %v2394
        %v2455 = vsel %vm425, %v2453, %v2399
        %v2457 = vsel %vm428, %v2455, %v2404
        %v2459 = vsel %vm431, %v2457, %v2409
        %v2462 = vsel %vm412, %v2331, %v2414
        %v2464 = vsel %vm416, %v2462, %v2419
        %v2466 = vsel %vm419, %v2464, %v2424
        %v2468 = vsel %vm422, %v2466, %v2429
        %v2470 = vsel %vm425, %v2468, %v2434
        %v2472 = vsel %vm428, %v2470, %v2439
        %v2474 = vsel %vm431, %v2472, %v2444
        %2475 = vrot.lane.b32.xlu0 %v1914, 126
        %v2476 = vpop.permute.xlu0 %2475
        %2477 = vrot.lane.b32.xlu0 %v1917, 126
        %v2478 = vpop.permute.xlu0 %2477
        %2479 = vrot.lane.b32.xlu0 %v1921, 126
        %v2480 = vpop.permute.xlu0 %2479
        %2481 = vrot.lane.b32.xlu0 %v1924, 126
        %v2482 = vpop.permute.xlu0 %2481
        %2483 = vrot.lane.b32.xlu0 %v1928, 126
        %v2484 = vpop.permute.xlu0 %2483
        %2485 = vrot.lane.b32.xlu0 %v1931, 126
        %v2486 = vpop.permute.xlu0 %2485
        %2487 = vrot.lane.b32.xlu0 %v1935, 126
        %v2488 = vpop.permute.xlu0 %2487
        %2489 = vrot.lane.b32.xlu0 %v1938, 126
        %v2490 = vpop.permute.xlu0 %2489
        %v2493 = vpack.i.b16 %v2480, %v2476
        %v2494 = vshrl.u32 %v2476, 16
        %v2495 = vshrl.u32 %v2480, 16
        %v2496 = vpack.i.b16 %v2495, %v2494
        %v2499 = vpack.i.b16 %v2488, %v2484
        %v2500 = vshrl.u32 %v2484, 16
        %v2501 = vshrl.u32 %v2488, 16
        %v2502 = vpack.i.b16 %v2501, %v2500
        %v2505 = vpack.i.b16 %v2482, %v2478
        %v2506 = vshrl.u32 %v2478, 16
        %v2507 = vshrl.u32 %v2482, 16
        %v2508 = vpack.i.b16 %v2507, %v2506
        %v2511 = vpack.i.b16 %v2490, %v2486
        %v2512 = vshrl.u32 %v2486, 16
        %v2513 = vshrl.u32 %v2490, 16
        %v2514 = vpack.i.b16 %v2513, %v2512
        %v2517 = vunpack.c.l.s4 1983009808
        %v2518 = vunpack.c.0.s8 %v2517
        %v2519 = vlaneseq
        %v2520 = vshrl.u32 %v2519, 7
        %v2521 = vsub.s32 %v2518, %v2520
        %v2522 = vrot.slane %v2493, %v2521
        %v2525 = vunpack.c.l.s4 1983009808
        %v2526 = vunpack.c.0.s8 %v2525
        %v2527 = vlaneseq
        %v2528 = vshrl.u32 %v2527, 7
        %v2529 = vsub.s32 %v2526, %v2528
        %v2530 = vrot.slane %v2499, %v2529
        %v2531 = vcombine.low %v2522, %v2530
        %v2532 = vcombine.high %v2522, %v2530
        %v2534 = vunpack.c.l.s4 1934713408
        %v2535 = vunpack.c.0.s8 %v2534
        %v2536 = vlaneseq
        %v2537 = vshrl.u32 %v2536, 7
        %v2538 = vsub.s32 %v2535, %v2537
        %v2539 = vrot.slane %v2531, %v2538
        %v2541 = vunpack.c.l.s4 1934713408
        %v2542 = vunpack.c.0.s8 %v2541
        %v2543 = vlaneseq
        %v2544 = vshrl.u32 %v2543, 7
        %v2545 = vsub.s32 %v2542, %v2544
        %v2546 = vrot.slane %v2532, %v2545
        %v2547 = vcombine.high %v2539, 0
        %v2548 = vcombine.high %v2546, 0
        %v2551 = vunpack.c.l.s4 1983009808
        %v2552 = vunpack.c.0.s8 %v2551
        %v2553 = vlaneseq
        %v2554 = vshrl.u32 %v2553, 7
        %v2555 = vsub.s32 %v2552, %v2554
        %v2556 = vrot.slane %v2496, %v2555
        %v2559 = vunpack.c.l.s4 1983009808
        %v2560 = vunpack.c.0.s8 %v2559
        %v2561 = vlaneseq
        %v2562 = vshrl.u32 %v2561, 7
        %v2563 = vsub.s32 %v2560, %v2562
        %v2564 = vrot.slane %v2502, %v2563
        %v2565 = vcombine.low %v2556, %v2564
        %v2566 = vcombine.high %v2556, %v2564
        %v2568 = vunpack.c.l.s4 1934713408
        %v2569 = vunpack.c.0.s8 %v2568
        %v2570 = vlaneseq
        %v2571 = vshrl.u32 %v2570, 7
        %v2572 = vsub.s32 %v2569, %v2571
        %v2573 = vrot.slane %v2565, %v2572
        %v2575 = vunpack.c.l.s4 1934713408
        %v2576 = vunpack.c.0.s8 %v2575
        %v2577 = vlaneseq
        %v2578 = vshrl.u32 %v2577, 7
        %v2579 = vsub.s32 %v2576, %v2578
        %v2580 = vrot.slane %v2566, %v2579
        %v2581 = vcombine.high %v2573, 0
        %v2582 = vcombine.high %v2580, 0
        %v2585 = vunpack.c.l.s4 1983009808
        %v2586 = vunpack.c.0.s8 %v2585
        %v2587 = vlaneseq
        %v2588 = vshrl.u32 %v2587, 7
        %v2589 = vsub.s32 %v2586, %v2588
        %v2590 = vrot.slane %v2505, %v2589
        %v2593 = vunpack.c.l.s4 1983009808
        %v2594 = vunpack.c.0.s8 %v2593
        %v2595 = vlaneseq
        %v2596 = vshrl.u32 %v2595, 7
        %v2597 = vsub.s32 %v2594, %v2596
        %v2598 = vrot.slane %v2511, %v2597
        %v2599 = vcombine.low %v2590, %v2598
        %v2600 = vcombine.high %v2590, %v2598
        %v2602 = vunpack.c.l.s4 1934713408
        %v2603 = vunpack.c.0.s8 %v2602
        %v2604 = vlaneseq
        %v2605 = vshrl.u32 %v2604, 7
        %v2606 = vsub.s32 %v2603, %v2605
        %v2607 = vrot.slane %v2599, %v2606
        %v2609 = vunpack.c.l.s4 1934713408
        %v2610 = vunpack.c.0.s8 %v2609
        %v2611 = vlaneseq
        %v2612 = vshrl.u32 %v2611, 7
        %v2613 = vsub.s32 %v2610, %v2612
        %v2614 = vrot.slane %v2600, %v2613
        %v2615 = vcombine.high %v2607, 0
        %v2616 = vcombine.high %v2614, 0
        %v2619 = vunpack.c.l.s4 1983009808
        %v2620 = vunpack.c.0.s8 %v2619
        %v2621 = vlaneseq
        %v2622 = vshrl.u32 %v2621, 7
        %v2623 = vsub.s32 %v2620, %v2622
        %v2624 = vrot.slane %v2508, %v2623
        %v2627 = vunpack.c.l.s4 1983009808
        %v2628 = vunpack.c.0.s8 %v2627
        %v2629 = vlaneseq
        %v2630 = vshrl.u32 %v2629, 7
        %v2631 = vsub.s32 %v2628, %v2630
        %v2632 = vrot.slane %v2514, %v2631
        %v2633 = vcombine.low %v2624, %v2632
        %v2634 = vcombine.high %v2624, %v2632
        %v2636 = vunpack.c.l.s4 1934713408
        %v2637 = vunpack.c.0.s8 %v2636
        %v2638 = vlaneseq
        %v2639 = vshrl.u32 %v2638, 7
        %v2640 = vsub.s32 %v2637, %v2639
        %v2641 = vrot.slane %v2633, %v2640
        %v2643 = vunpack.c.l.s4 1934713408
        %v2644 = vunpack.c.0.s8 %v2643
        %v2645 = vlaneseq
        %v2646 = vshrl.u32 %v2645, 7
        %v2647 = vsub.s32 %v2644, %v2646
        %v2648 = vrot.slane %v2634, %v2647
        %v2649 = vcombine.high %v2641, 0
        %v2650 = vcombine.high %v2648, 0
        %v2652 = vunpack.c.l.b16 %v2573
        %v2653 = vpack.c.b16 %v2652, %v2652
        %2654 = vrot.lane.b32.xlu0 %v2653, 16
        %v2655 = vpop.permute.xlu0 %2654
        %v2657 = vunpack.c.l.b16 %v2547
        %v2658 = vpack.c.b16 %v2657, %v2657
        %2659 = vrot.lane.b32.xlu0 %v2658, 32
        %v2660 = vpop.permute.xlu0 %2659
        %v2662 = vunpack.c.l.b16 %v2581
        %v2663 = vpack.c.b16 %v2662, %v2662
        %2664 = vrot.lane.b32.xlu0 %v2663, 48
        %v2665 = vpop.permute.xlu0 %2664
        %v2667 = vunpack.c.l.b16 %v2546
        %v2668 = vpack.c.b16 %v2667, %v2667
        %2669 = vrot.lane.b32.xlu0 %v2668, 64
        %v2670 = vpop.permute.xlu0 %2669
        %v2672 = vunpack.c.l.b16 %v2580
        %v2673 = vpack.c.b16 %v2672, %v2672
        %2674 = vrot.lane.b32.xlu0 %v2673, 80
        %v2675 = vpop.permute.xlu0 %2674
        %v2677 = vunpack.c.l.b16 %v2548
        %v2678 = vpack.c.b16 %v2677, %v2677
        %2679 = vrot.lane.b32.xlu0 %v2678, 96
        %v2680 = vpop.permute.xlu0 %2679
        %v2682 = vunpack.c.l.b16 %v2582
        %v2683 = vpack.c.b16 %v2682, %v2682
        %2684 = vrot.lane.b32.xlu0 %v2683, 112
        %v2685 = vpop.permute.xlu0 %2684
        %v2687 = vunpack.c.l.b16 %v2641
        %v2688 = vpack.c.b16 %v2687, %v2687
        %2689 = vrot.lane.b32.xlu0 %v2688, 16
        %v2690 = vpop.permute.xlu0 %2689
        %v2692 = vunpack.c.l.b16 %v2615
        %v2693 = vpack.c.b16 %v2692, %v2692
        %2694 = vrot.lane.b32.xlu0 %v2693, 32
        %v2695 = vpop.permute.xlu0 %2694
        %v2697 = vunpack.c.l.b16 %v2649
        %v2698 = vpack.c.b16 %v2697, %v2697
        %2699 = vrot.lane.b32.xlu0 %v2698, 48
        %v2700 = vpop.permute.xlu0 %2699
        %v2702 = vunpack.c.l.b16 %v2614
        %v2703 = vpack.c.b16 %v2702, %v2702
        %2704 = vrot.lane.b32.xlu0 %v2703, 64
        %v2705 = vpop.permute.xlu0 %2704
        %v2707 = vunpack.c.l.b16 %v2648
        %v2708 = vpack.c.b16 %v2707, %v2707
        %2709 = vrot.lane.b32.xlu0 %v2708, 80
        %v2710 = vpop.permute.xlu0 %2709
        %v2712 = vunpack.c.l.b16 %v2616
        %v2713 = vpack.c.b16 %v2712, %v2712
        %2714 = vrot.lane.b32.xlu0 %v2713, 96
        %v2715 = vpop.permute.xlu0 %2714
        %v2717 = vunpack.c.l.b16 %v2650
        %v2718 = vpack.c.b16 %v2717, %v2717
        %2719 = vrot.lane.b32.xlu0 %v2718, 112
        %v2720 = vpop.permute.xlu0 %2719
        %v2723 = vsel %vm412, %v2539, %v2655
        %v2725 = vsel %vm416, %v2723, %v2660
        %v2727 = vsel %vm419, %v2725, %v2665
        %v2729 = vsel %vm422, %v2727, %v2670
        %v2731 = vsel %vm425, %v2729, %v2675
        %v2733 = vsel %vm428, %v2731, %v2680
        %v2735 = vsel %vm431, %v2733, %v2685
        %v2738 = vsel %vm412, %v2607, %v2690
        %v2740 = vsel %vm416, %v2738, %v2695
        %v2742 = vsel %vm419, %v2740, %v2700
        %v2744 = vsel %vm422, %v2742, %v2705
        %v2746 = vsel %vm425, %v2744, %v2710
        %v2748 = vsel %vm428, %v2746, %v2715
        %v2750 = vsel %vm431, %v2748, %v2720
        %v2753 = vrot.slane %v717, 6
        %v2754 = vrot.slane %v732, 6
        %v2757 = vrot.slane %v993, 4
        %v2758 = vrot.slane %v1008, 4
        %v2761 = vrot.slane %v1336, 2
        %v2762 = vrot.slane %v1351, 2
        %v2765 = vrot.slane %v1888, 6
        %v2766 = vrot.slane %v1903, 6
        %v2769 = vrot.slane %v2183, 4
        %v2770 = vrot.slane %v2198, 4
        %v2773 = vrot.slane %v2459, 2
        %v2774 = vrot.slane %v2474, 2
        %vm2775 = vcmask 1041408
        %v2777 = vsel %vm2775, %v433, %v2753
        %v2779 = vsel %vm2775, %v448, %v2754
        %vm2780 = vcmask 1043456
        %v2782 = vsel %vm2780, %v2777, %v2757
        %v2784 = vsel %vm2780, %v2779, %v2758
        %vm2785 = vcmask 1045504
        %v2787 = vsel %vm2785, %v2782, %v2761
        %v2790 = vsel %vm2785, %v2784, %v2762
        %v2793 = vsel %vm2775, %v1612, %v2765
        %v2795 = vsel %vm2775, %v1627, %v2766
        %v2797 = vsel %vm2780, %v2793, %v2769
        %v2799 = vsel %vm2780, %v2795, %v2770
        %v2801 = vsel %vm2785, %v2797, %v2773
        %v2804 = vsel %vm2785, %v2799, %v2774
        %v2806 = vld [vmem:[%s1] sm:$0xf]
        %v2807 = vld [vmem:[%s2] sm:$0xff]
        %2809 = vset.pattern.permute.xlu0 0
        %2810 = vperm.xlu0 %2809, %v2807
        %v2811 = vpop.permute.xlu0 %2810
        %vm2813 = vcmask 293888
        %v2815 = vsel %vm2813, %v2806, 0
        %v2817 = vsel %vm2775, %v2735, 0
        %v2819 = vsel %vm2775, %v2750, 0
        %2821 = vmatprep.subr.bf16.mxu0 %v2790
        %2822 = vmatpush1.bf16.msra.mxu0 %v2787
        %2823 = vmatprep.subr.bf16.mxu0 %v2804
        %2824 = vmatpush1.bf16.msra.mxu0 %v2801
        %2825 = vmatprep.subr.bf16.mxu0 %v2819
        %2826 = vmatpush1.bf16.msra.mxu0 %v2817
        %2827 = vmatprep.subr.bf16.mxu0 0
        %2828 = vmatpush1.bf16.msra.mxu0 0
        %2829 = vmatprep.subr.bf16.mxu0 0
        %2830 = vmatpush1.bf16.msra.mxu0 0
        %2831 = vmatprep.subr.bf16.mxu0 0
        %2832 = vmatpush1.bf16.msra.mxu0 0
        %2833 = vmatprep.subr.bf16.mxu0 0
        %2834 = vmatpush1.bf16.msra.mxu0 0
        %2835 = vmatprep.subr.bf16.mxu0 0
        %2836 = vmatpush1.bf16.msra.mxu0 0
        %2837 = vmatprep.subr.bf16.mxu0 0
        %2838 = vmatpush1.bf16.msra.mxu0 0
        %2839 = vmatprep.subr.bf16.mxu0 0
        %2840 = vmatpush1.bf16.msra.mxu0 0
        %2841 = vmatprep.subr.bf16.mxu0 0
        %2842 = vmatpush1.bf16.msra.mxu0 0
        %2843 = vmatprep.subr.bf16.mxu0 0
        %2844 = vmatpush1.bf16.msra.mxu0 0
        %2845 = vmatprep.subr.bf16.mxu0 0
        %2846 = vmatpush1.bf16.msra.mxu0 0
        %2847 = vmatprep.subr.bf16.mxu0 0
        %2848 = vmatpush1.bf16.msra.mxu0 0
        %2849 = vmatprep.subr.bf16.mxu0 0
        %2850 = vmatpush1.bf16.msra.mxu0 0
        %2851 = vmatprep.subr.bf16.mxu0 0
        %2852 = vmatpush1.bf16.msra.mxu0 0
        %2853 = vmatprep.mubr.bf16.mxu0 0
        %2854 = vmatmul.mubr.bf16.gmra.mrb[0].mxu0 %v2815
        %v2855 = vpop.f32.mrb[0].mxu0
        %v2856 = vadd.f32 %v2811, %v2855
        %v2857 = vpop.f32.mrb[0].mxu0
        %v2858 = vadd.f32 %v2811, %v2857
        %v2859 = vpop.f32.mrb[0].mxu0
        %v2860 = vpop.f32.mrb[0].mxu0
        %2861 = vdwg.mxu0
        %vm2862 = vcmp.ge.f32.partialorder %v2856, 0.0
        %vm2863 = vcmp.ge.f32.partialorder %v2858, 0.0
        %v2864 = vmul.f32 %v2856, 0.2
        %v2865 = vmul.f32 %v2858, 0.2
        %v2866 = vsel %vm2862, %v2856, %v2864
        %v2867 = vsel %vm2863, %v2858, %v2865
        %2868 = vst [vmem:[%s163] sm:$0xff] %v2866
        %2869 = vst [vmem:[%s163 + $0x8] sm:$0xff] %v2867
        %s2870 = sand.u32 %s93, 1
        %s2871 = scalar_lea.sflag [#allocation3], %s2870
        %s2872 = sand.u32 %s93, 1
        %s2873 = smul.addr %s2872, 16
        %s2874 = scalar_lea.vmem [#allocation2], %s2873
        // Predicated region
        $region33: #{tpu_custom_call.1} parent=31 // pred_check
          %p2875 = pneg %p103
        $region34: #{tpu_custom_call.1} parent=31 // pred_check_branch
          %2877 = sbr.rel (%p2875) target = $region36
        $region35: #{tpu_custom_call.1} parent=31 // pred_region
          %s2879 = ssub.s32 256, 256
          %2880 = vsyncadd %s2871, %s2879
          %s2881 = smul.addr %s17, 2
          %s2882 = smul.addr %s2881, 128
          %s2883 = scalar_lea.hbm %s3, %s2882
          %s2885 = sshll.u32 %s2874, 4
          %s2886 = int_to_ptr.vmem [resolvable:$true] %s2885
          %2888 = dma.vmem_to_hbm [thread:$0]  %s2886, 256, %s2883, %s2871
        $region36: #{tpu_custom_call.1} parent=31 // pred_fallthru
          _
      $region32: #{tpu_custom_call.1} parent=5 // pred_fallthru
        _
      %p2889 = scmp.le.s32.totalorder 2, %s12
      // Predicated region
      $region37: #{tpu_custom_call.1} parent=5 // pred_check
        %p2890 = pneg %p2889
      $region38: #{tpu_custom_call.1} parent=5 // pred_check_branch
        %2892 = sbr.rel (%p2890) target = $region40
      $region39: #{tpu_custom_call.1} parent=5 // pred_region
        %s2893 = ssub.s32 %s12, 2
        // Predicated region
        $region41: #{tpu_custom_call.1} parent=39 // pred_check
          %p2894 = pneg %p109
        $region42: #{tpu_custom_call.1} parent=39 // pred_check_branch
          %2896 = sbr.rel (%p2894) target = $region44
        $region43: #{tpu_custom_call.1} parent=39 // pred_region
          %s2897 = sand.u32 %s94, 1
          %s2898 = scalar_lea.sflag [#allocation3], %s2897
          %s2899 = sand.u32 %s94, 1
          %s2900 = smul.addr %s2899, 16
          %s2901 = scalar_lea.vmem [#allocation2], %s2900
          %2902 = dma.done %s2898, 256
        $region44: #{tpu_custom_call.1} parent=39 // pred_fallthru
          _
      $region40: #{tpu_custom_call.1} parent=5 // pred_fallthru
        _
    $region6: #{tpu_custom_call.1} parent=1 // loop_footer
      %s16 = sadd.s32 1, %s12
    $region7: #{tpu_custom_call.1} parent=1 // loop_footer_branch
      %11 = sbr.rel target = $region3
    $region8: #{tpu_custom_call.1} parent=1 // loop_exit
      _
    %2903 = vsyncpa [#allocation3], 1
    %s2904 = scalar_lea.sflag [#allocation3], 1
    %2905 = vsyncpa %s2904, 1

</llo_original>
